<compile_context>
chip_gen: v6e
topology: v6e:2x2x1
jax: 0.10.0
libtpu: 0.0.40
codegen_flags: <defaults>
</compile_context>

<pallas_src>
import functools
import math

import jax
import jax.numpy as jnp
from jax import lax
from jax.experimental import pallas as pl
from jax.experimental.pallas import tpu as pltpu


# ----------------------------------------------------------------------------
# Kernel: full multi-head attention for one batch element.
# ----------------------------------------------------------------------------
def _mha_kernel(q_ref, k_ref, v_ref, mask_ref,
                wq_ref, bq_ref, wk_ref, bk_ref, wv_ref, bv_ref, wo_ref, bo_ref,
                out_ref, attnw_ref, *, n_heads, d_k):
    S, D = q_ref.shape[1], q_ref.shape[2]

    # Full-width projections: [S, D] @ [D, D] (bf16 operands, f32 accumulate).
    xq = q_ref[0].astype(jnp.bfloat16)
    xk = k_ref[0].astype(jnp.bfloat16)
    xv = v_ref[0].astype(jnp.bfloat16)
    # NOTE: 1/sqrt(d_k) is already folded into wq_ref / bq_ref by the wrapper.
    q = jnp.dot(xq, wq_ref[...], preferred_element_type=jnp.float32) + bq_ref[...]
    k = jnp.dot(xk, wk_ref[...], preferred_element_type=jnp.float32) + bk_ref[...]
    v = jnp.dot(xv, wv_ref[...], preferred_element_type=jnp.float32) + bv_ref[...]

    mask = mask_ref[0] != 0                                   # [S, S] bool

    # Output accumulator starts with the output-projection bias (added once).
    acc = jnp.broadcast_to(bo_ref[...].astype(jnp.float32), (S, D))

    # Statically unrolled per-head loop (n_heads is a small compile-time int).
    for h in range(n_heads):
        lo, hi = h * d_k, (h + 1) * d_k
        qh = q[:, lo:hi].astype(jnp.bfloat16)                 # [S, d_k]
        kh = k[:, lo:hi].astype(jnp.bfloat16)
        vh = v[:, lo:hi].astype(jnp.bfloat16)

        # scores = qh @ kh^T  (contract last dims directly, no transpose op).
        s = lax.dot_general(qh, kh, (((1,), (1,)), ((), ())),
                            preferred_element_type=jnp.float32)  # [S, S]
        s = jnp.where(mask, jnp.float32(-1e9), s)             # masked_fill_

        m = jnp.max(s, axis=-1, keepdims=True)
        e = jnp.exp(s - m)
        denom = jnp.sum(e, axis=-1, keepdims=True)
        w = e * pl.reciprocal(denom, approx=True)             # softmax(dim=-1)
        attnw_ref[0, h, :, :] = w

        ctx = jnp.dot(w.astype(jnp.bfloat16), vh,
                      preferred_element_type=jnp.float32)     # [S, d_k]
        # concat(heads) @ Wout  ==  sum_h ctx_h @ Wout[h*d_k:(h+1)*d_k, :]
        acc = acc + jnp.dot(ctx.astype(jnp.bfloat16), wo_ref[lo:hi, :],
                            preferred_element_type=jnp.float32)

    out_ref[0] = acc


# ----------------------------------------------------------------------------
# Wrapper
# ----------------------------------------------------------------------------
def multi_head_attention(Q, K, V, attn_mask, params, n_heads):
    """Q, K, V: [B, S, d_model]; attn_mask: [B, S, S] (True = masked).

    Returns (output [B, S, d_model] f32, attn_weights [B, n_heads, S, S] f32).
    """
    B, S, D = Q.shape
    assert D % n_heads == 0
    d_k = D // n_heads
    wq, bq, wk, bk, wv, bv, wo, bo = params

    # Fold the 1/sqrt(d_k) attention scale into the Q projection once, and
    # feed the MXU bf16 weights (f32 biases / accumulation).
    scale = jnp.float32(1.0 / math.sqrt(d_k))
    wq_b = (wq * scale).astype(jnp.bfloat16)
    bq_s = (bq * scale).astype(jnp.float32)
    wk_b = wk.astype(jnp.bfloat16)
    wv_b = wv.astype(jnp.bfloat16)
    wo_b = wo.astype(jnp.bfloat16)
    mask_i32 = attn_mask.astype(jnp.int32)

    kernel = functools.partial(_mha_kernel, n_heads=n_heads, d_k=d_k)
    batch3 = lambda b: (b, 0, 0)
    const2 = lambda b: (0, 0)

    out, attnw = pl.pallas_call(
        kernel,
        out_shape=(jax.ShapeDtypeStruct((B, S, D), jnp.float32),
                   jax.ShapeDtypeStruct((B, n_heads, S, S), jnp.float32)),
        grid=(B,),
        in_specs=[
            pl.BlockSpec((1, S, D), batch3),                     # Q
            pl.BlockSpec((1, S, D), batch3),                     # K
            pl.BlockSpec((1, S, D), batch3),                     # V
            pl.BlockSpec((1, S, S), batch3),                     # attn_mask
            pl.BlockSpec((D, D), const2), pl.BlockSpec((1, D), const2),  # WQ, bQ
            pl.BlockSpec((D, D), const2), pl.BlockSpec((1, D), const2),  # WK, bK
            pl.BlockSpec((D, D), const2), pl.BlockSpec((1, D), const2),  # WV, bV
            pl.BlockSpec((D, D), const2), pl.BlockSpec((1, D), const2),  # Wout, bout
        ],
        out_specs=(pl.BlockSpec((1, S, D), batch3),
                   pl.BlockSpec((1, n_heads, S, S), lambda b: (b, 0, 0, 0))),
        compiler_params=pltpu.CompilerParams(dimension_semantics=("parallel",)),
    )(Q, K, V, mask_i32, wq_b, bq_s, wk_b, bk, wv_b, bv, wo_b, bo)
    return out, attnw


# ----------------------------------------------------------------------------
# Parameter init (PyTorch nn.Linear-style uniform bounds; W stored [in, out]).
# ----------------------------------------------------------------------------
def _linear_params(key, fan_in, fan_out):
    kw, kb = jax.random.split(key)
    bound = 1.0 / math.sqrt(fan_in)
    w = jax.random.uniform(kw, (fan_in, fan_out), jnp.float32, -bound, bound)
    b = jax.random.uniform(kb, (1, fan_out), jnp.float32, -bound, bound)
    return w, b


def init_mha_params(key, d_model):
    ks = jax.random.split(key, 4)
    wq, bq = _linear_params(ks[0], d_model, d_model)
    wk, bk = _linear_params(ks[1], d_model, d_model)
    wv, bv = _linear_params(ks[2], d_model, d_model)
    wo, bo = _linear_params(ks[3], d_model, d_model)
    return (wq, bq, wk, bk, wv, bv, wo, bo)


# ----------------------------------------------------------------------------
# Pure-JAX f32 reference (mirrors the PyTorch forward exactly).
# ----------------------------------------------------------------------------
def mha_reference(Q, K, V, attn_mask, params, n_heads):
    wq, bq, wk, bk, wv, bv, wo, bo = params
    B, S, D = Q.shape
    d_k = D // n_heads
    q = Q @ wq + bq
    k = K @ wk + bk
    v = V @ wv + bv
    qh = q.reshape(B, S, n_heads, d_k).transpose(0, 2, 1, 3)
    kh = k.reshape(B, S, n_heads, d_k).transpose(0, 2, 1, 3)
    vh = v.reshape(B, S, n_heads, d_k).transpose(0, 2, 1, 3)
    scores = jnp.einsum('bhqd,bhkd->bhqk', qh, kh) / math.sqrt(d_k)
    scores = jnp.where(attn_mask[:, None, :, :], jnp.float32(-1e9), scores)
    w = jax.nn.softmax(scores, axis=-1)
    ctx = jnp.einsum('bhqk,bhkd->bhqd', w, vh)
    ctx = ctx.transpose(0, 2, 1, 3).reshape(B, S, D)
    out = ctx @ wo + bo
    return out, w


if __name__ == "__main__":
    d_model, n_heads = 128, 4
    B, S = 2, 8

    key = jax.random.PRNGKey(0)
    kp, kq, kk, kv = jax.random.split(key, 4)
    params = init_mha_params(kp, d_model)

    Q = jax.random.normal(kq, (B, S, d_model), jnp.float32)
    K = jax.random.normal(kk, (B, S, d_model), jnp.float32)
    V = jax.random.normal(kv, (B, S, d_model), jnp.float32)
    idx = jnp.arange(S)
    attn_mask = jnp.broadcast_to(idx[None, :] > idx[:, None], (B, S, S))  # causal

    out, attnw = multi_head_attention(Q, K, V, attn_mask, params, n_heads)
    jax.block_until_ready((out, attnw))

    # Correctness vs pure-JAX f32 reference (kernel uses bf16 matmul operands
    # with f32 accumulation, hence the relaxed tolerances).
    ref_out, ref_w = mha_reference(Q, K, V, attn_mask, params, n_heads)
    assert out.shape == (B, S, d_model)
    assert attnw.shape == (B, n_heads, S, S)
    assert bool(jnp.allclose(jnp.sum(attnw, axis=-1), 1.0, atol=1e-2))
    assert bool(jnp.allclose(attnw, ref_w, atol=3e-2, rtol=3e-2))
    assert bool(jnp.allclose(out, ref_out, atol=5e-2, rtol=5e-2))

    print("KERNEL_OK")
</pallas_src>

<mosaic_0001>
module attributes {stable_mosaic.version = 11 : i64} {
  func.func @_mha_kernel(%arg0: i32, %arg1: memref<1x8x128xf32, #tpu.memory_space<vmem>>, %arg2: memref<1x8x128xf32, #tpu.memory_space<vmem>>, %arg3: memref<1x8x128xf32, #tpu.memory_space<vmem>>, %arg4: memref<1x8x8xi32, #tpu.memory_space<vmem>>, %arg5: memref<128x128xbf16, #tpu.memory_space<vmem>>, %arg6: memref<1x128xf32, #tpu.memory_space<vmem>>, %arg7: memref<128x128xbf16, #tpu.memory_space<vmem>>, %arg8: memref<1x128xf32, #tpu.memory_space<vmem>>, %arg9: memref<128x128xbf16, #tpu.memory_space<vmem>>, %arg10: memref<1x128xf32, #tpu.memory_space<vmem>>, %arg11: memref<128x128xbf16, #tpu.memory_space<vmem>>, %arg12: memref<1x128xf32, #tpu.memory_space<vmem>>, %arg13: memref<1x8x128xf32, #tpu.memory_space<vmem>>, %arg14: memref<1x4x8x8xf32, #tpu.memory_space<vmem>>) attributes {dimension_semantics = [#tpu.dimension_semantics<parallel>], iteration_bounds = array<i64: 2>, scalar_prefetch = 0 : i64, scratch_operands = 0 : i64, tpu.core_type = #tpu.core_type<tc>, window_params = [{transform_indices = @transform_0, window_bounds = array<i64: 1, 8, 128>}, {transform_indices = @transform_1, window_bounds = array<i64: 1, 8, 128>}, {transform_indices = @transform_2, window_bounds = array<i64: 1, 8, 128>}, {transform_indices = @transform_3, window_bounds = array<i64: 1, 8, 8>}, {pipeline_mode = #tpu.pipeline_mode<synchronous>, transform_indices = @transform_4, window_bounds = array<i64: 128, 128>}, {pipeline_mode = #tpu.pipeline_mode<synchronous>, transform_indices = @transform_5, window_bounds = array<i64: 1, 128>}, {pipeline_mode = #tpu.pipeline_mode<synchronous>, transform_indices = @transform_6, window_bounds = array<i64: 128, 128>}, {pipeline_mode = #tpu.pipeline_mode<synchronous>, transform_indices = @transform_7, window_bounds = array<i64: 1, 128>}, {pipeline_mode = #tpu.pipeline_mode<synchronous>, transform_indices = @transform_8, window_bounds = array<i64: 128, 128>}, {pipeline_mode = #tpu.pipeline_mode<synchronous>, transform_indices = @transform_9, window_bounds = array<i64: 1, 128>}, {pipeline_mode = #tpu.pipeline_mode<synchronous>, transform_indices = @transform_10, window_bounds = array<i64: 128, 128>}, {pipeline_mode = #tpu.pipeline_mode<synchronous>, transform_indices = @transform_11, window_bounds = array<i64: 1, 128>}, {transform_indices = @transform_12, window_bounds = array<i64: 1, 8, 128>}, {transform_indices = @transform_13, window_bounds = array<i64: 1, 4, 8, 8>}]} {
    %c0 = arith.constant 0 : index
    %c0_0 = arith.constant 0 : index
    %c0_1 = arith.constant 0 : index
    %0 = vector.load %arg1[%c0, %c0_0, %c0_1] : memref<1x8x128xf32, #tpu.memory_space<vmem>>, vector<1x8x128xf32>
    %1 = vector.shape_cast %0 : vector<1x8x128xf32> to vector<8x128xf32>
    %2 = arith.truncf %1 : vector<8x128xf32> to vector<8x128xbf16>
    %c0_2 = arith.constant 0 : index
    %c0_3 = arith.constant 0 : index
    %c0_4 = arith.constant 0 : index
    %3 = vector.load %arg2[%c0_2, %c0_3, %c0_4] : memref<1x8x128xf32, #tpu.memory_space<vmem>>, vector<1x8x128xf32>
    %4 = vector.shape_cast %3 : vector<1x8x128xf32> to vector<8x128xf32>
    %5 = arith.truncf %4 : vector<8x128xf32> to vector<8x128xbf16>
    %c0_5 = arith.constant 0 : index
    %c0_6 = arith.constant 0 : index
    %c0_7 = arith.constant 0 : index
    %6 = vector.load %arg3[%c0_5, %c0_6, %c0_7] : memref<1x8x128xf32, #tpu.memory_space<vmem>>, vector<1x8x128xf32>
    %7 = vector.shape_cast %6 : vector<1x8x128xf32> to vector<8x128xf32>
    %8 = arith.truncf %7 : vector<8x128xf32> to vector<8x128xbf16>
    %c0_8 = arith.constant 0 : index
    %c0_9 = arith.constant 0 : index
    %9 = vector.load %arg5[%c0_8, %c0_9] : memref<128x128xbf16, #tpu.memory_space<vmem>>, vector<128x128xbf16>
    %cst = arith.constant dense<0.000000e+00> : vector<8x128xf32>
    %10 = tpu.matmul %2, %9, %cst {dimension_numbers = #tpu.dot_dimension_numbers<[1], [0], [0], [1], [0, 0, 1, 1], [], []>} : vector<8x128xbf16>, vector<128x128xbf16>, vector<8x128xf32> -> vector<8x128xf32>
    %c0_10 = arith.constant 0 : index
    %c0_11 = arith.constant 0 : index
    %11 = vector.load %arg6[%c0_10, %c0_11] : memref<1x128xf32, #tpu.memory_space<vmem>>, vector<1x128xf32>
    %12 = vector.broadcast %11 : vector<1x128xf32> to vector<8x128xf32>
    %13 = arith.addf %10, %12 : vector<8x128xf32>
    %c0_12 = arith.constant 0 : index
    %c0_13 = arith.constant 0 : index
    %14 = vector.load %arg7[%c0_12, %c0_13] : memref<128x128xbf16, #tpu.memory_space<vmem>>, vector<128x128xbf16>
    %cst_14 = arith.constant dense<0.000000e+00> : vector<8x128xf32>
    %15 = tpu.matmul %5, %14, %cst_14 {dimension_numbers = #tpu.dot_dimension_numbers<[1], [0], [0], [1], [0, 0, 1, 1], [], []>} : vector<8x128xbf16>, vector<128x128xbf16>, vector<8x128xf32> -> vector<8x128xf32>
    %c0_15 = arith.constant 0 : index
    %c0_16 = arith.constant 0 : index
    %16 = vector.load %arg8[%c0_15, %c0_16] : memref<1x128xf32, #tpu.memory_space<vmem>>, vector<1x128xf32>
    %17 = vector.broadcast %16 : vector<1x128xf32> to vector<8x128xf32>
    %18 = arith.addf %15, %17 : vector<8x128xf32>
    %c0_17 = arith.constant 0 : index
    %c0_18 = arith.constant 0 : index
    %19 = vector.load %arg9[%c0_17, %c0_18] : memref<128x128xbf16, #tpu.memory_space<vmem>>, vector<128x128xbf16>
    %cst_19 = arith.constant dense<0.000000e+00> : vector<8x128xf32>
    %20 = tpu.matmul %8, %19, %cst_19 {dimension_numbers = #tpu.dot_dimension_numbers<[1], [0], [0], [1], [0, 0, 1, 1], [], []>} : vector<8x128xbf16>, vector<128x128xbf16>, vector<8x128xf32> -> vector<8x128xf32>
    %c0_20 = arith.constant 0 : index
    %c0_21 = arith.constant 0 : index
    %21 = vector.load %arg10[%c0_20, %c0_21] : memref<1x128xf32, #tpu.memory_space<vmem>>, vector<1x128xf32>
    %22 = vector.broadcast %21 : vector<1x128xf32> to vector<8x128xf32>
    %23 = arith.addf %20, %22 : vector<8x128xf32>
    %c0_22 = arith.constant 0 : index
    %c0_23 = arith.constant 0 : index
    %c0_24 = arith.constant 0 : index
    %24 = vector.load %arg4[%c0_22, %c0_23, %c0_24] : memref<1x8x8xi32, #tpu.memory_space<vmem>>, vector<1x8x8xi32>
    %25 = vector.shape_cast %24 : vector<1x8x8xi32> to vector<8x8xi32>
    %c0_i32 = arith.constant 0 : i32
    %26 = vector.broadcast %c0_i32 : i32 to vector<8x8xi32>
    %27 = arith.cmpi ne, %25, %26 : vector<8x8xi32>
    %c0_25 = arith.constant 0 : index
    %c0_26 = arith.constant 0 : index
    %28 = vector.load %arg12[%c0_25, %c0_26] : memref<1x128xf32, #tpu.memory_space<vmem>>, vector<1x128xf32>
    %29 = vector.shape_cast %28 : vector<1x128xf32> to vector<1x128xf32>
    %30 = vector.broadcast %29 : vector<1x128xf32> to vector<8x128xf32>
    %31 = vector.extract_strided_slice %13 {offsets = [0, 0], sizes = [8, 32], strides = [1, 1]} : vector<8x128xf32> to vector<8x32xf32>
    %32 = arith.truncf %31 : vector<8x32xf32> to vector<8x32xbf16>
    %33 = vector.extract_strided_slice %18 {offsets = [0, 0], sizes = [8, 32], strides = [1, 1]} : vector<8x128xf32> to vector<8x32xf32>
    %34 = arith.truncf %33 : vector<8x32xf32> to vector<8x32xbf16>
    %35 = vector.extract_strided_slice %23 {offsets = [0, 0], sizes = [8, 32], strides = [1, 1]} : vector<8x128xf32> to vector<8x32xf32>
    %36 = arith.truncf %35 : vector<8x32xf32> to vector<8x32xbf16>
    %cst_27 = arith.constant dense<0.000000e+00> : vector<8x8xf32>
    %37 = tpu.matmul %32, %34, %cst_27 {dimension_numbers = #tpu.dot_dimension_numbers<[1], [1], [0], [0], [0, 0, 1, 0], [], []>} : vector<8x32xbf16>, vector<8x32xbf16>, vector<8x8xf32> -> vector<8x8xf32>
    %cst_28 = arith.constant -1.000000e+09 : f32
    %38 = vector.broadcast %cst_28 : f32 to vector<8x8xf32>
    %39 = arith.select %27, %38, %37 : vector<8x8xi1>, vector<8x8xf32>
    %cst_29 = arith.constant dense<0xFF800000> : vector<8xf32>
    %40 = vector.multi_reduction <maximumf>, %39, %cst_29 [1] : vector<8x8xf32> to vector<8xf32>
    %41 = vector.shape_cast %40 : vector<8xf32> to vector<8x1xf32>
    %42 = vector.broadcast %41 : vector<8x1xf32> to vector<8x8xf32>
    %43 = arith.subf %39, %42 : vector<8x8xf32>
    %44 = math.exp %43 : vector<8x8xf32>
    %cst_30 = arith.constant dense<0.000000e+00> : vector<8xf32>
    %45 = vector.multi_reduction <add>, %44, %cst_30 [1] : vector<8x8xf32> to vector<8xf32>
    %46 = vector.shape_cast %45 : vector<8xf32> to vector<8x1xf32>
    %47 = tpu.reciprocal %46 {approx = true} : vector<8x1xf32> -> vector<8x1xf32>
    %48 = vector.broadcast %47 : vector<8x1xf32> to vector<8x8xf32>
    %49 = arith.mulf %44, %48 : vector<8x8xf32>
    %c0_31 = arith.constant 0 : index
    %c0_32 = arith.constant 0 : index
    %c0_33 = arith.constant 0 : index
    %c0_34 = arith.constant 0 : index
    %50 = vector.load %arg14[%c0_31, %c0_32, %c0_33, %c0_34] : memref<1x4x8x8xf32, #tpu.memory_space<vmem>>, vector<1x1x8x8xf32>
    %51 = vector.shape_cast %50 : vector<1x1x8x8xf32> to vector<8x8xf32>
    %52 = vector.shape_cast %49 : vector<8x8xf32> to vector<1x1x8x8xf32>
    tpu.vector_store %arg14[%c0_31, %c0_32, %c0_33, %c0_34], %52 {strides = array<i32>} : memref<1x4x8x8xf32, #tpu.memory_space<vmem>>, vector<1x1x8x8xf32>,
    %53 = arith.truncf %49 : vector<8x8xf32> to vector<8x8xbf16>
    %cst_35 = arith.constant dense<0.000000e+00> : vector<8x32xf32>
    %54 = tpu.matmul %53, %36, %cst_35 {dimension_numbers = #tpu.dot_dimension_numbers<[1], [0], [0], [1], [0, 0, 1, 1], [], []>} : vector<8x8xbf16>, vector<8x32xbf16>, vector<8x32xf32> -> vector<8x32xf32>
    %55 = arith.truncf %54 : vector<8x32xf32> to vector<8x32xbf16>
    %c0_36 = arith.constant 0 : index
    %c0_37 = arith.constant 0 : index
    %56 = vector.load %arg11[%c0_36, %c0_37] : memref<128x128xbf16, #tpu.memory_space<vmem>>, vector<32x128xbf16>
    %cst_38 = arith.constant dense<0.000000e+00> : vector<8x128xf32>
    %57 = tpu.matmul %55, %56, %cst_38 {dimension_numbers = #tpu.dot_dimension_numbers<[1], [0], [0], [1], [0, 0, 1, 1], [], []>} : vector<8x32xbf16>, vector<32x128xbf16>, vector<8x128xf32> -> vector<8x128xf32>
    %58 = arith.addf %30, %57 : vector<8x128xf32>
    %59 = vector.extract_strided_slice %13 {offsets = [0, 32], sizes = [8, 32], strides = [1, 1]} : vector<8x128xf32> to vector<8x32xf32>
    %60 = arith.truncf %59 : vector<8x32xf32> to vector<8x32xbf16>
    %61 = vector.extract_strided_slice %18 {offsets = [0, 32], sizes = [8, 32], strides = [1, 1]} : vector<8x128xf32> to vector<8x32xf32>
    %62 = arith.truncf %61 : vector<8x32xf32> to vector<8x32xbf16>
    %63 = vector.extract_strided_slice %23 {offsets = [0, 32], sizes = [8, 32], strides = [1, 1]} : vector<8x128xf32> to vector<8x32xf32>
    %64 = arith.truncf %63 : vector<8x32xf32> to vector<8x32xbf16>
    %cst_39 = arith.constant dense<0.000000e+00> : vector<8x8xf32>
    %65 = tpu.matmul %60, %62, %cst_39 {dimension_numbers = #tpu.dot_dimension_numbers<[1], [1], [0], [0], [0, 0, 1, 0], [], []>} : vector<8x32xbf16>, vector<8x32xbf16>, vector<8x8xf32> -> vector<8x8xf32>
    %cst_40 = arith.constant -1.000000e+09 : f32
    %66 = vector.broadcast %cst_40 : f32 to vector<8x8xf32>
    %67 = arith.select %27, %66, %65 : vector<8x8xi1>, vector<8x8xf32>
    %cst_41 = arith.constant dense<0xFF800000> : vector<8xf32>
    %68 = vector.multi_reduction <maximumf>, %67, %cst_41 [1] : vector<8x8xf32> to vector<8xf32>
    %69 = vector.shape_cast %68 : vector<8xf32> to vector<8x1xf32>
    %70 = vector.broadcast %69 : vector<8x1xf32> to vector<8x8xf32>
    %71 = arith.subf %67, %70 : vector<8x8xf32>
    %72 = math.exp %71 : vector<8x8xf32>
    %cst_42 = arith.constant dense<0.000000e+00> : vector<8xf32>
    %73 = vector.multi_reduction <add>, %72, %cst_42 [1] : vector<8x8xf32> to vector<8xf32>
    %74 = vector.shape_cast %73 : vector<8xf32> to vector<8x1xf32>
    %75 = tpu.reciprocal %74 {approx = true} : vector<8x1xf32> -> vector<8x1xf32>
    %76 = vector.broadcast %75 : vector<8x1xf32> to vector<8x8xf32>
    %77 = arith.mulf %72, %76 : vector<8x8xf32>
    %c0_43 = arith.constant 0 : index
    %c1 = arith.constant 1 : index
    %c0_44 = arith.constant 0 : index
    %c0_45 = arith.constant 0 : index
    %78 = vector.load %arg14[%c0_43, %c1, %c0_44, %c0_45] : memref<1x4x8x8xf32, #tpu.memory_space<vmem>>, vector<1x1x8x8xf32>
    %79 = vector.shape_cast %78 : vector<1x1x8x8xf32> to vector<8x8xf32>
    %80 = vector.shape_cast %77 : vector<8x8xf32> to vector<1x1x8x8xf32>
    tpu.vector_store %arg14[%c0_43, %c1, %c0_44, %c0_45], %80 {strides = array<i32>} : memref<1x4x8x8xf32, #tpu.memory_space<vmem>>, vector<1x1x8x8xf32>,
    %81 = arith.truncf %77 : vector<8x8xf32> to vector<8x8xbf16>
    %cst_46 = arith.constant dense<0.000000e+00> : vector<8x32xf32>
    %82 = tpu.matmul %81, %64, %cst_46 {dimension_numbers = #tpu.dot_dimension_numbers<[1], [0], [0], [1], [0, 0, 1, 1], [], []>} : vector<8x8xbf16>, vector<8x32xbf16>, vector<8x32xf32> -> vector<8x32xf32>
    %83 = arith.truncf %82 : vector<8x32xf32> to vector<8x32xbf16>
    %c32 = arith.constant 32 : index
    %c0_47 = arith.constant 0 : index
    %84 = vector.load %arg11[%c32, %c0_47] : memref<128x128xbf16, #tpu.memory_space<vmem>>, vector<32x128xbf16>
    %cst_48 = arith.constant dense<0.000000e+00> : vector<8x128xf32>
    %85 = tpu.matmul %83, %84, %cst_48 {dimension_numbers = #tpu.dot_dimension_numbers<[1], [0], [0], [1], [0, 0, 1, 1], [], []>} : vector<8x32xbf16>, vector<32x128xbf16>, vector<8x128xf32> -> vector<8x128xf32>
    %86 = arith.addf %58, %85 : vector<8x128xf32>
    %87 = vector.extract_strided_slice %13 {offsets = [0, 64], sizes = [8, 32], strides = [1, 1]} : vector<8x128xf32> to vector<8x32xf32>
    %88 = arith.truncf %87 : vector<8x32xf32> to vector<8x32xbf16>
    %89 = vector.extract_strided_slice %18 {offsets = [0, 64], sizes = [8, 32], strides = [1, 1]} : vector<8x128xf32> to vector<8x32xf32>
    %90 = arith.truncf %89 : vector<8x32xf32> to vector<8x32xbf16>
    %91 = vector.extract_strided_slice %23 {offsets = [0, 64], sizes = [8, 32], strides = [1, 1]} : vector<8x128xf32> to vector<8x32xf32>
    %92 = arith.truncf %91 : vector<8x32xf32> to vector<8x32xbf16>
    %cst_49 = arith.constant dense<0.000000e+00> : vector<8x8xf32>
    %93 = tpu.matmul %88, %90, %cst_49 {dimension_numbers = #tpu.dot_dimension_numbers<[1], [1], [0], [0], [0, 0, 1, 0], [], []>} : vector<8x32xbf16>, vector<8x32xbf16>, vector<8x8xf32> -> vector<8x8xf32>
    %cst_50 = arith.constant -1.000000e+09 : f32
    %94 = vector.broadcast %cst_50 : f32 to vector<8x8xf32>
    %95 = arith.select %27, %94, %93 : vector<8x8xi1>, vector<8x8xf32>
    %cst_51 = arith.constant dense<0xFF800000> : vector<8xf32>
    %96 = vector.multi_reduction <maximumf>, %95, %cst_51 [1] : vector<8x8xf32> to vector<8xf32>
    %97 = vector.shape_cast %96 : vector<8xf32> to vector<8x1xf32>
    %98 = vector.broadcast %97 : vector<8x1xf32> to vector<8x8xf32>
    %99 = arith.subf %95, %98 : vector<8x8xf32>
    %100 = math.exp %99 : vector<8x8xf32>
    %cst_52 = arith.constant dense<0.000000e+00> : vector<8xf32>
    %101 = vector.multi_reduction <add>, %100, %cst_52 [1] : vector<8x8xf32> to vector<8xf32>
    %102 = vector.shape_cast %101 : vector<8xf32> to vector<8x1xf32>
    %103 = tpu.reciprocal %102 {approx = true} : vector<8x1xf32> -> vector<8x1xf32>
    %104 = vector.broadcast %103 : vector<8x1xf32> to vector<8x8xf32>
    %105 = arith.mulf %100, %104 : vector<8x8xf32>
    %c0_53 = arith.constant 0 : index
    %c2 = arith.constant 2 : index
    %c0_54 = arith.constant 0 : index
    %c0_55 = arith.constant 0 : index
    %106 = vector.load %arg14[%c0_53, %c2, %c0_54, %c0_55] : memref<1x4x8x8xf32, #tpu.memory_space<vmem>>, vector<1x1x8x8xf32>
    %107 = vector.shape_cast %106 : vector<1x1x8x8xf32> to vector<8x8xf32>
    %108 = vector.shape_cast %105 : vector<8x8xf32> to vector<1x1x8x8xf32>
    tpu.vector_store %arg14[%c0_53, %c2, %c0_54, %c0_55], %108 {strides = array<i32>} : memref<1x4x8x8xf32, #tpu.memory_space<vmem>>, vector<1x1x8x8xf32>,
    %109 = arith.truncf %105 : vector<8x8xf32> to vector<8x8xbf16>
    %cst_56 = arith.constant dense<0.000000e+00> : vector<8x32xf32>
    %110 = tpu.matmul %109, %92, %cst_56 {dimension_numbers = #tpu.dot_dimension_numbers<[1], [0], [0], [1], [0, 0, 1, 1], [], []>} : vector<8x8xbf16>, vector<8x32xbf16>, vector<8x32xf32> -> vector<8x32xf32>
    %111 = arith.truncf %110 : vector<8x32xf32> to vector<8x32xbf16>
    %c64 = arith.constant 64 : index
    %c0_57 = arith.constant 0 : index
    %112 = vector.load %arg11[%c64, %c0_57] : memref<128x128xbf16, #tpu.memory_space<vmem>>, vector<32x128xbf16>
    %cst_58 = arith.constant dense<0.000000e+00> : vector<8x128xf32>
    %113 = tpu.matmul %111, %112, %cst_58 {dimension_numbers = #tpu.dot_dimension_numbers<[1], [0], [0], [1], [0, 0, 1, 1], [], []>} : vector<8x32xbf16>, vector<32x128xbf16>, vector<8x128xf32> -> vector<8x128xf32>
    %114 = arith.addf %86, %113 : vector<8x128xf32>
    %115 = vector.extract_strided_slice %13 {offsets = [0, 96], sizes = [8, 32], strides = [1, 1]} : vector<8x128xf32> to vector<8x32xf32>
    %116 = arith.truncf %115 : vector<8x32xf32> to vector<8x32xbf16>
    %117 = vector.extract_strided_slice %18 {offsets = [0, 96], sizes = [8, 32], strides = [1, 1]} : vector<8x128xf32> to vector<8x32xf32>
    %118 = arith.truncf %117 : vector<8x32xf32> to vector<8x32xbf16>
    %119 = vector.extract_strided_slice %23 {offsets = [0, 96], sizes = [8, 32], strides = [1, 1]} : vector<8x128xf32> to vector<8x32xf32>
    %120 = arith.truncf %119 : vector<8x32xf32> to vector<8x32xbf16>
    %cst_59 = arith.constant dense<0.000000e+00> : vector<8x8xf32>
    %121 = tpu.matmul %116, %118, %cst_59 {dimension_numbers = #tpu.dot_dimension_numbers<[1], [1], [0], [0], [0, 0, 1, 0], [], []>} : vector<8x32xbf16>, vector<8x32xbf16>, vector<8x8xf32> -> vector<8x8xf32>
    %cst_60 = arith.constant -1.000000e+09 : f32
    %122 = vector.broadcast %cst_60 : f32 to vector<8x8xf32>
    %123 = arith.select %27, %122, %121 : vector<8x8xi1>, vector<8x8xf32>
    %cst_61 = arith.constant dense<0xFF800000> : vector<8xf32>
    %124 = vector.multi_reduction <maximumf>, %123, %cst_61 [1] : vector<8x8xf32> to vector<8xf32>
    %125 = vector.shape_cast %124 : vector<8xf32> to vector<8x1xf32>
    %126 = vector.broadcast %125 : vector<8x1xf32> to vector<8x8xf32>
    %127 = arith.subf %123, %126 : vector<8x8xf32>
    %128 = math.exp %127 : vector<8x8xf32>
    %cst_62 = arith.constant dense<0.000000e+00> : vector<8xf32>
    %129 = vector.multi_reduction <add>, %128, %cst_62 [1] : vector<8x8xf32> to vector<8xf32>
    %130 = vector.shape_cast %129 : vector<8xf32> to vector<8x1xf32>
    %131 = tpu.reciprocal %130 {approx = true} : vector<8x1xf32> -> vector<8x1xf32>
    %132 = vector.broadcast %131 : vector<8x1xf32> to vector<8x8xf32>
    %133 = arith.mulf %128, %132 : vector<8x8xf32>
    %c0_63 = arith.constant 0 : index
    %c3 = arith.constant 3 : index
    %c0_64 = arith.constant 0 : index
    %c0_65 = arith.constant 0 : index
    %134 = vector.load %arg14[%c0_63, %c3, %c0_64, %c0_65] : memref<1x4x8x8xf32, #tpu.memory_space<vmem>>, vector<1x1x8x8xf32>
    %135 = vector.shape_cast %134 : vector<1x1x8x8xf32> to vector<8x8xf32>
    %136 = vector.shape_cast %133 : vector<8x8xf32> to vector<1x1x8x8xf32>
    tpu.vector_store %arg14[%c0_63, %c3, %c0_64, %c0_65], %136 {strides = array<i32>} : memref<1x4x8x8xf32, #tpu.memory_space<vmem>>, vector<1x1x8x8xf32>,
    %137 = arith.truncf %133 : vector<8x8xf32> to vector<8x8xbf16>
    %cst_66 = arith.constant dense<0.000000e+00> : vector<8x32xf32>
    %138 = tpu.matmul %137, %120, %cst_66 {dimension_numbers = #tpu.dot_dimension_numbers<[1], [0], [0], [1], [0, 0, 1, 1], [], []>} : vector<8x8xbf16>, vector<8x32xbf16>, vector<8x32xf32> -> vector<8x32xf32>
    %139 = arith.truncf %138 : vector<8x32xf32> to vector<8x32xbf16>
    %c96 = arith.constant 96 : index
    %c0_67 = arith.constant 0 : index
    %140 = vector.load %arg11[%c96, %c0_67] : memref<128x128xbf16, #tpu.memory_space<vmem>>, vector<32x128xbf16>
    %cst_68 = arith.constant dense<0.000000e+00> : vector<8x128xf32>
    %141 = tpu.matmul %139, %140, %cst_68 {dimension_numbers = #tpu.dot_dimension_numbers<[1], [0], [0], [1], [0, 0, 1, 1], [], []>} : vector<8x32xbf16>, vector<32x128xbf16>, vector<8x128xf32> -> vector<8x128xf32>
    %142 = arith.addf %114, %141 : vector<8x128xf32>
    %c0_69 = arith.constant 0 : index
    %c0_70 = arith.constant 0 : index
    %c0_71 = arith.constant 0 : index
    %143 = vector.load %arg13[%c0_69, %c0_70, %c0_71] : memref<1x8x128xf32, #tpu.memory_space<vmem>>, vector<1x8x128xf32>
    %144 = vector.shape_cast %143 : vector<1x8x128xf32> to vector<8x128xf32>
    %145 = vector.shape_cast %142 : vector<8x128xf32> to vector<1x8x128xf32>
    tpu.vector_store %arg13[%c0_69, %c0_70, %c0_71], %145 {strides = array<i32>} : memref<1x8x128xf32, #tpu.memory_space<vmem>>, vector<1x8x128xf32>,
    return
  }
  func.func @transform_0(%arg0: i32) -> (i32, i32, i32) {
    %c0_i32 = arith.constant 0 : i32
    %c0_i32_0 = arith.constant 0 : i32
    %c0_i32_1 = arith.constant 0 : i32
    return %arg0, %c0_i32, %c0_i32_0 : i32, i32, i32
  }
  func.func @transform_1(%arg0: i32) -> (i32, i32, i32) {
    %c0_i32 = arith.constant 0 : i32
    %c0_i32_0 = arith.constant 0 : i32
    %c0_i32_1 = arith.constant 0 : i32
    return %arg0, %c0_i32, %c0_i32_0 : i32, i32, i32
  }
  func.func @transform_2(%arg0: i32) -> (i32, i32, i32) {
    %c0_i32 = arith.constant 0 : i32
    %c0_i32_0 = arith.constant 0 : i32
    %c0_i32_1 = arith.constant 0 : i32
    return %arg0, %c0_i32, %c0_i32_0 : i32, i32, i32
  }
  func.func @transform_3(%arg0: i32) -> (i32, i32, i32) {
    %c0_i32 = arith.constant 0 : i32
    %c0_i32_0 = arith.constant 0 : i32
    %c0_i32_1 = arith.constant 0 : i32
    return %arg0, %c0_i32, %c0_i32_0 : i32, i32, i32
  }
  func.func @transform_4(%arg0: i32) -> (i32, i32) {
    %c0_i32 = arith.constant 0 : i32
    %c0_i32_0 = arith.constant 0 : i32
    %c0_i32_1 = arith.constant 0 : i32
    return %c0_i32, %c0_i32_0 : i32, i32
  }
  func.func @transform_5(%arg0: i32) -> (i32, i32) {
    %c0_i32 = arith.constant 0 : i32
    %c0_i32_0 = arith.constant 0 : i32
    %c0_i32_1 = arith.constant 0 : i32
    return %c0_i32, %c0_i32_0 : i32, i32
  }
  func.func @transform_6(%arg0: i32) -> (i32, i32) {
    %c0_i32 = arith.constant 0 : i32
    %c0_i32_0 = arith.constant 0 : i32
    %c0_i32_1 = arith.constant 0 : i32
    return %c0_i32, %c0_i32_0 : i32, i32
  }
  func.func @transform_7(%arg0: i32) -> (i32, i32) {
    %c0_i32 = arith.constant 0 : i32
    %c0_i32_0 = arith.constant 0 : i32
    %c0_i32_1 = arith.constant 0 : i32
    return %c0_i32, %c0_i32_0 : i32, i32
  }
  func.func @transform_8(%arg0: i32) -> (i32, i32) {
    %c0_i32 = arith.constant 0 : i32
    %c0_i32_0 = arith.constant 0 : i32
    %c0_i32_1 = arith.constant 0 : i32
    return %c0_i32, %c0_i32_0 : i32, i32
  }
  func.func @transform_9(%arg0: i32) -> (i32, i32) {
    %c0_i32 = arith.constant 0 : i32
    %c0_i32_0 = arith.constant 0 : i32
    %c0_i32_1 = arith.constant 0 : i32
    return %c0_i32, %c0_i32_0 : i32, i32
  }
  func.func @transform_10(%arg0: i32) -> (i32, i32) {
    %c0_i32 = arith.constant 0 : i32
    %c0_i32_0 = arith.constant 0 : i32
    %c0_i32_1 = arith.constant 0 : i32
    return %c0_i32, %c0_i32_0 : i32, i32
  }
  func.func @transform_11(%arg0: i32) -> (i32, i32) {
    %c0_i32 = arith.constant 0 : i32
    %c0_i32_0 = arith.constant 0 : i32
    %c0_i32_1 = arith.constant 0 : i32
    return %c0_i32, %c0_i32_0 : i32, i32
  }
  func.func @transform_12(%arg0: i32) -> (i32, i32, i32) {
    %c0_i32 = arith.constant 0 : i32
    %c0_i32_0 = arith.constant 0 : i32
    %c0_i32_1 = arith.constant 0 : i32
    return %arg0, %c0_i32, %c0_i32_0 : i32, i32, i32
  }
  func.func @transform_13(%arg0: i32) -> (i32, i32, i32, i32) {
    %c0_i32 = arith.constant 0 : i32
    %c0_i32_0 = arith.constant 0 : i32
    %c0_i32_1 = arith.constant 0 : i32
    %c0_i32_2 = arith.constant 0 : i32
    return %arg0, %c0_i32, %c0_i32_0, %c0_i32_1 : i32, i32, i32, i32
  }
}

</mosaic_0001>

<llo_original>
// kernel: tpu_custom_call.1
$region0: #{tpu_custom_call.1}
  #allocation0 [shape = 'u32[]', space=smem, size = 0x4, offset = 0x4, fixed_abs, tag = 'smem constant byte address 0x4 - core index']
  #allocation1 [shape = 'u32[144,128]{1,0:T(1,128)}', space=vmem, size = 0x12000, scoped, tag = 'internal scratch']
  %s0 = inlined_call_operand.hbm [shape: f32[2,8,128], index: 0, kind: input, shape index: {}]
  %s1 = inlined_call_operand.hbm [shape: f32[2,8,128], index: 1, kind: input, shape index: {}]
  %s2 = inlined_call_operand.hbm [shape: f32[2,8,128], index: 2, kind: input, shape index: {}]
  %s3 = inlined_call_operand.hbm [shape: s32[2,8,8], index: 3, kind: input, shape index: {}]
  %s4 = inlined_call_operand.hbm [shape: bf16[128,128], index: 4, kind: input, shape index: {}]
  %s5 = inlined_call_operand.vmem [shape: f32[1,128], index: 5, kind: input, shape index: {}]
  %s6 = inlined_call_operand.hbm [shape: bf16[128,128], index: 6, kind: input, shape index: {}]
  %s7 = inlined_call_operand.vmem [shape: f32[1,128], index: 7, kind: input, shape index: {}]
  %s8 = inlined_call_operand.hbm [shape: bf16[128,128], index: 8, kind: input, shape index: {}]
  %s9 = inlined_call_operand.vmem [shape: f32[1,128], index: 9, kind: input, shape index: {}]
  %s10 = inlined_call_operand.hbm [shape: bf16[128,128], index: 10, kind: input, shape index: {}]
  %s11 = inlined_call_operand.vmem [shape: f32[1,128], index: 11, kind: input, shape index: {}]
  %s12 = inlined_call_operand.hbm [shape: f32[2,8,128], index: 12, kind: output, shape index: {0}]
  %s13 = inlined_call_operand.hbm [shape: f32[2,4,8,8], index: 13, kind: output, shape index: {1}]
  %14 = xla_tuple %s12, %s13
  %s15 = sld [smem:[#allocation0]]
  $region121: #{tpu_custom_call.1} parent=0
    _
  %s17 = ssub.s32 1, %s15
  %s18 = scalar_select 0, %s17, %s15
  $region1: #{tpu_custom_call.1} parent=0
    #allocation2 [shape = 'u8[8192]{0}', space=vmem, size = 0x2000, scoped, tag = 'input window, operand 0']
    #allocation3 [shape = 's32[2]{0}', space=sflag, size = 0x8, scoped, tag = 'scoped memory for tpu_custom_call.1']
    #allocation4 [shape = 's32[2]{0}', space=sflag, size = 0x8, scoped, tag = 'scoped memory for tpu_custom_call.1']
    #allocation5 [shape = 'u8[8192]{0}', space=vmem, size = 0x2000, scoped, tag = 'input window, operand 1']
    #allocation6 [shape = 's32[2]{0}', space=sflag, size = 0x8, scoped, tag = 'scoped memory for tpu_custom_call.1']
    #allocation7 [shape = 'u8[8192]{0}', space=vmem, size = 0x2000, scoped, tag = 'input window, operand 2']
    #allocation8 [shape = 'u8[8192]{0}', space=vmem, size = 0x2000, scoped, tag = 'input window, operand 3']
    #allocation9 [shape = 's32[2]{0}', space=sflag, size = 0x8, scoped, tag = 'scoped memory for tpu_custom_call.1']
    #allocation10 [shape = 'u8[32768]{0}', space=vmem, size = 0x8000, scoped, tag = 'input window, operand 4, single buffered']
    #allocation11 [shape = 'u8[32768]{0}', space=vmem, size = 0x8000, scoped, tag = 'input window, operand 6, single buffered']
    #allocation12 [shape = 's32[1]{0}', space=sflag, size = 0x4, scoped, tag = 'scoped memory for tpu_custom_call.1']
    #allocation13 [shape = 'u8[32768]{0}', space=vmem, size = 0x8000, scoped, tag = 'input window, operand 8, single buffered']
    #allocation14 [shape = 'u8[32768]{0}', space=vmem, size = 0x8000, scoped, tag = 'input window, operand 10, single buffered']
    #allocation15 [shape = 's32[1]{0}', space=sflag, size = 0x4, scoped, tag = 'scoped memory for tpu_custom_call.1']
    #allocation16 [shape = 'u8[8192]{0}', space=vmem, size = 0x2000, scoped, tag = 'output window, operand 0']
    #allocation17 [shape = 'u8[32768]{0}', space=vmem, size = 0x8000, scoped, tag = 'output window, operand 1']
    #allocation18 [shape = 's32[2]{0}', space=sflag, size = 0x8, scoped, tag = 'scoped memory for tpu_custom_call.1']
    %19 = vsyncpa [#allocation3], 0
    %s20 = scalar_lea.sflag [#allocation3], 1
    %21 = vsyncpa %s20, 0
    %22 = vsyncpa [#allocation6], 0
    %s23 = scalar_lea.sflag [#allocation6], 1
    %24 = vsyncpa %s23, 0
    %25 = vsyncpa [#allocation9], 0
    %s26 = scalar_lea.sflag [#allocation9], 1
    %27 = vsyncpa %s26, 0
    %28 = vsyncpa [#allocation12], 0
    %29 = vsyncpa [#allocation15], 0
    %30 = vsyncpa [#allocation4], 0
    %s31 = scalar_lea.sflag [#allocation4], 1
    %32 = vsyncpa %s31, 0
    %33 = vsyncpa [#allocation18], 0
    %s34 = scalar_lea.sflag [#allocation18], 1
    %35 = vsyncpa %s34, 0
    loop: start=0, step=1, limit=4
    $region2: #{tpu_custom_call.1} parent=1 // loop_pre_header
      _
    $region3: #{tpu_custom_call.1} parent=1 // loop_header
      %s37 = sphi 0, %s41
      %p38 = scmp.ge.s32.totalorder %s37, 4
      %s47 = sphi 0, %s49
      %s50 = sphi 0, %s47
      %s51 = sphi 0, %s50
      %s67 = sphi 0, %s51
      %s73 = sphi 0, %s75
      %s76 = sphi 0, %s73
      %s77 = sphi 0, %s76
      %s93 = sphi 0, %s77
      %s99 = sphi 0, %s101
      %s102 = sphi 0, %s99
      %s103 = sphi 0, %s102
      %s119 = sphi 0, %s103
      %s125 = sphi 0, %s127
      %s128 = sphi 0, %s125
      %s129 = sphi 0, %s128
      %s145 = sphi 0, %s129
      %s149 = sphi 0, %s149
      %s151 = sphi 0, %s149
      %s152 = sphi 0, %s151
      %s166 = sphi 0, %s152
      %s170 = sphi 0, %s170
      %s172 = sphi 0, %s170
      %s173 = sphi 0, %s172
      %s187 = sphi 0, %s173
      %s191 = sphi 0, %s191
      %s193 = sphi 0, %s191
      %s194 = sphi 0, %s193
      %s208 = sphi 0, %s194
      %s212 = sphi 0, %s212
      %s214 = sphi 0, %s212
      %s215 = sphi 0, %s214
      %s229 = sphi 0, %s215
      %s233 = sphi 0, %s233
      %s235 = sphi 0, %s233
      %s236 = sphi 0, %s235
      %s250 = sphi 0, %s236
      %s254 = sphi 0, %s254
      %s256 = sphi 0, %s254
      %s257 = sphi 0, %s256
      %s271 = sphi 0, %s257
      %s275 = sphi 0, %s275
      %s277 = sphi 0, %s275
      %s278 = sphi 0, %s277
      %s292 = sphi 0, %s278
      %s296 = sphi 0, %s296
      %s298 = sphi 0, %s296
      %s299 = sphi 0, %s298
      %s313 = sphi 0, %s299
      %s319 = sphi 0, %s321
      %s322 = sphi 0, %s319
      %s323 = sphi 0, %s322
      %s339 = sphi 0, %s323
      %s345 = sphi 0, %s347
      %s348 = sphi 0, %s345
      %s349 = sphi 0, %s348
      %s365 = sphi 0, %s349
    $region4: #{tpu_custom_call.1} parent=1 // loop_header_branch
      %40 = sbr.rel (%p38) target = $region8
    $region5: #{tpu_custom_call.1} parent=1 // loop_body
      %s42 = ssub.s32 %s37, 1
      %s43 = ssub.s32 %s37, 2
      %s44 = sadd.s32 %s37, 1
      %s45 = ssub.s32 %s37, %s44
      %p46 = scmp.eq.s32.totalorder %s45, 0
      %s48 = sadd.s32 %s47, 1
      %s49 = scalar_select %p46, %s47, %s48
      %p52 = pneg %p46
      %p53 = scmp.eq.s32.totalorder %s37, 1
      %p54 = por %p52, %p53
      %p55 = scmp.ne.s32.totalorder %s47, %s50
      %p56 = scmp.eq.s32.totalorder %s37, 0
      %p57 = por %p55, %p56
      %p58 = scmp.ne.s32.totalorder %s47, %s50
      %p59 = scmp.eq.s32.totalorder %s42, 1
      %p60 = por %p58, %p59
      %p61 = scmp.ne.s32.totalorder %s50, %s51
      %p62 = scmp.eq.s32.totalorder %s42, 0
      %p63 = por %p61, %p62
      %p64 = scmp.ne.s32.totalorder %s50, %s51
      %p65 = scmp.eq.s32.totalorder %s43, 1
      %p66 = por %p64, %p65
      %p68 = scmp.ne.s32.totalorder %s51, %s67
      %p69 = scmp.eq.s32.totalorder %s43, 0
      %p70 = por %p68, %p69
      %s71 = ssub.s32 %s37, %s44
      %p72 = scmp.eq.s32.totalorder %s71, 0
      %s74 = sadd.s32 %s73, 1
      %s75 = scalar_select %p72, %s73, %s74
      %p78 = pneg %p72
      %p79 = scmp.eq.s32.totalorder %s37, 1
      %p80 = por %p78, %p79
      %p81 = scmp.ne.s32.totalorder %s73, %s76
      %p82 = scmp.eq.s32.totalorder %s37, 0
      %p83 = por %p81, %p82
      %p84 = scmp.ne.s32.totalorder %s73, %s76
      %p85 = scmp.eq.s32.totalorder %s42, 1
      %p86 = por %p84, %p85
      %p87 = scmp.ne.s32.totalorder %s76, %s77
      %p88 = scmp.eq.s32.totalorder %s42, 0
      %p89 = por %p87, %p88
      %p90 = scmp.ne.s32.totalorder %s76, %s77
      %p91 = scmp.eq.s32.totalorder %s43, 1
      %p92 = por %p90, %p91
      %p94 = scmp.ne.s32.totalorder %s77, %s93
      %p95 = scmp.eq.s32.totalorder %s43, 0
      %p96 = por %p94, %p95
      %s97 = ssub.s32 %s37, %s44
      %p98 = scmp.eq.s32.totalorder %s97, 0
      %s100 = sadd.s32 %s99, 1
      %s101 = scalar_select %p98, %s99, %s100
      %p104 = pneg %p98
      %p105 = scmp.eq.s32.totalorder %s37, 1
      %p106 = por %p104, %p105
      %p107 = scmp.ne.s32.totalorder %s99, %s102
      %p108 = scmp.eq.s32.totalorder %s37, 0
      %p109 = por %p107, %p108
      %p110 = scmp.ne.s32.totalorder %s99, %s102
      %p111 = scmp.eq.s32.totalorder %s42, 1
      %p112 = por %p110, %p111
      %p113 = scmp.ne.s32.totalorder %s102, %s103
      %p114 = scmp.eq.s32.totalorder %s42, 0
      %p115 = por %p113, %p114
      %p116 = scmp.ne.s32.totalorder %s102, %s103
      %p117 = scmp.eq.s32.totalorder %s43, 1
      %p118 = por %p116, %p117
      %p120 = scmp.ne.s32.totalorder %s103, %s119
      %p121 = scmp.eq.s32.totalorder %s43, 0
      %p122 = por %p120, %p121
      %s123 = ssub.s32 %s37, %s44
      %p124 = scmp.eq.s32.totalorder %s123, 0
      %s126 = sadd.s32 %s125, 1
      %s127 = scalar_select %p124, %s125, %s126
      %p130 = pneg %p124
      %p131 = scmp.eq.s32.totalorder %s37, 1
      %p132 = por %p130, %p131
      %p133 = scmp.ne.s32.totalorder %s125, %s128
      %p134 = scmp.eq.s32.totalorder %s37, 0
      %p135 = por %p133, %p134
      %p136 = scmp.ne.s32.totalorder %s125, %s128
      %p137 = scmp.eq.s32.totalorder %s42, 1
      %p138 = por %p136, %p137
      %p139 = scmp.ne.s32.totalorder %s128, %s129
      %p140 = scmp.eq.s32.totalorder %s42, 0
      %p141 = por %p139, %p140
      %p142 = scmp.ne.s32.totalorder %s128, %s129
      %p143 = scmp.eq.s32.totalorder %s43, 1
      %p144 = por %p142, %p143
      %p146 = scmp.ne.s32.totalorder %s129, %s145
      %p147 = scmp.eq.s32.totalorder %s43, 0
      %p148 = por %p146, %p147
      %s150 = sadd.s32 %s149, 1
      %p153 = scmp.eq.s32.totalorder %s37, 1
      %p154 = scmp.ne.s32.totalorder %s149, %s151
      %p155 = scmp.eq.s32.totalorder %s37, 0
      %p156 = por %p154, %p155
      %p157 = scmp.ne.s32.totalorder %s149, %s151
      %p158 = scmp.eq.s32.totalorder %s42, 1
      %p159 = por %p157, %p158
      %p160 = scmp.ne.s32.totalorder %s151, %s152
      %p161 = scmp.eq.s32.totalorder %s42, 0
      %p162 = por %p160, %p161
      %p163 = scmp.ne.s32.totalorder %s151, %s152
      %p164 = scmp.eq.s32.totalorder %s43, 1
      %p165 = por %p163, %p164
      %p167 = scmp.ne.s32.totalorder %s152, %s166
      %p168 = scmp.eq.s32.totalorder %s43, 0
      %p169 = por %p167, %p168
      %s171 = sadd.s32 %s170, 1
      %p174 = scmp.eq.s32.totalorder %s37, 1
      %p175 = scmp.ne.s32.totalorder %s170, %s172
      %p176 = scmp.eq.s32.totalorder %s37, 0
      %p177 = por %p175, %p176
      %p178 = scmp.ne.s32.totalorder %s170, %s172
      %p179 = scmp.eq.s32.totalorder %s42, 1
      %p180 = por %p178, %p179
      %p181 = scmp.ne.s32.totalorder %s172, %s173
      %p182 = scmp.eq.s32.totalorder %s42, 0
      %p183 = por %p181, %p182
      %p184 = scmp.ne.s32.totalorder %s172, %s173
      %p185 = scmp.eq.s32.totalorder %s43, 1
      %p186 = por %p184, %p185
      %p188 = scmp.ne.s32.totalorder %s173, %s187
      %p189 = scmp.eq.s32.totalorder %s43, 0
      %p190 = por %p188, %p189
      %s192 = sadd.s32 %s191, 1
      %p195 = scmp.eq.s32.totalorder %s37, 1
      %p196 = scmp.ne.s32.totalorder %s191, %s193
      %p197 = scmp.eq.s32.totalorder %s37, 0
      %p198 = por %p196, %p197
      %p199 = scmp.ne.s32.totalorder %s191, %s193
      %p200 = scmp.eq.s32.totalorder %s42, 1
      %p201 = por %p199, %p200
      %p202 = scmp.ne.s32.totalorder %s193, %s194
      %p203 = scmp.eq.s32.totalorder %s42, 0
      %p204 = por %p202, %p203
      %p205 = scmp.ne.s32.totalorder %s193, %s194
      %p206 = scmp.eq.s32.totalorder %s43, 1
      %p207 = por %p205, %p206
      %p209 = scmp.ne.s32.totalorder %s194, %s208
      %p210 = scmp.eq.s32.totalorder %s43, 0
      %p211 = por %p209, %p210
      %s213 = sadd.s32 %s212, 1
      %p216 = scmp.eq.s32.totalorder %s37, 1
      %p217 = scmp.ne.s32.totalorder %s212, %s214
      %p218 = scmp.eq.s32.totalorder %s37, 0
      %p219 = por %p217, %p218
      %p220 = scmp.ne.s32.totalorder %s212, %s214
      %p221 = scmp.eq.s32.totalorder %s42, 1
      %p222 = por %p220, %p221
      %p223 = scmp.ne.s32.totalorder %s214, %s215
      %p224 = scmp.eq.s32.totalorder %s42, 0
      %p225 = por %p223, %p224
      %p226 = scmp.ne.s32.totalorder %s214, %s215
      %p227 = scmp.eq.s32.totalorder %s43, 1
      %p228 = por %p226, %p227
      %p230 = scmp.ne.s32.totalorder %s215, %s229
      %p231 = scmp.eq.s32.totalorder %s43, 0
      %p232 = por %p230, %p231
      %s234 = sadd.s32 %s233, 1
      %p237 = scmp.eq.s32.totalorder %s37, 1
      %p238 = scmp.ne.s32.totalorder %s233, %s235
      %p239 = scmp.eq.s32.totalorder %s37, 0
      %p240 = por %p238, %p239
      %p241 = scmp.ne.s32.totalorder %s233, %s235
      %p242 = scmp.eq.s32.totalorder %s42, 1
      %p243 = por %p241, %p242
      %p244 = scmp.ne.s32.totalorder %s235, %s236
      %p245 = scmp.eq.s32.totalorder %s42, 0
      %p246 = por %p244, %p245
      %p247 = scmp.ne.s32.totalorder %s235, %s236
      %p248 = scmp.eq.s32.totalorder %s43, 1
      %p249 = por %p247, %p248
      %p251 = scmp.ne.s32.totalorder %s236, %s250
      %p252 = scmp.eq.s32.totalorder %s43, 0
      %p253 = por %p251, %p252
      %s255 = sadd.s32 %s254, 1
      %p258 = scmp.eq.s32.totalorder %s37, 1
      %p259 = scmp.ne.s32.totalorder %s254, %s256
      %p260 = scmp.eq.s32.totalorder %s37, 0
      %p261 = por %p259, %p260
      %p262 = scmp.ne.s32.totalorder %s254, %s256
      %p263 = scmp.eq.s32.totalorder %s42, 1
      %p264 = por %p262, %p263
      %p265 = scmp.ne.s32.totalorder %s256, %s257
      %p266 = scmp.eq.s32.totalorder %s42, 0
      %p267 = por %p265, %p266
      %p268 = scmp.ne.s32.totalorder %s256, %s257
      %p269 = scmp.eq.s32.totalorder %s43, 1
      %p270 = por %p268, %p269
      %p272 = scmp.ne.s32.totalorder %s257, %s271
      %p273 = scmp.eq.s32.totalorder %s43, 0
      %p274 = por %p272, %p273
      %s276 = sadd.s32 %s275, 1
      %p279 = scmp.eq.s32.totalorder %s37, 1
      %p280 = scmp.ne.s32.totalorder %s275, %s277
      %p281 = scmp.eq.s32.totalorder %s37, 0
      %p282 = por %p280, %p281
      %p283 = scmp.ne.s32.totalorder %s275, %s277
      %p284 = scmp.eq.s32.totalorder %s42, 1
      %p285 = por %p283, %p284
      %p286 = scmp.ne.s32.totalorder %s277, %s278
      %p287 = scmp.eq.s32.totalorder %s42, 0
      %p288 = por %p286, %p287
      %p289 = scmp.ne.s32.totalorder %s277, %s278
      %p290 = scmp.eq.s32.totalorder %s43, 1
      %p291 = por %p289, %p290
      %p293 = scmp.ne.s32.totalorder %s278, %s292
      %p294 = scmp.eq.s32.totalorder %s43, 0
      %p295 = por %p293, %p294
      %s297 = sadd.s32 %s296, 1
      %p300 = scmp.eq.s32.totalorder %s37, 1
      %p301 = scmp.ne.s32.totalorder %s296, %s298
      %p302 = scmp.eq.s32.totalorder %s37, 0
      %p303 = por %p301, %p302
      %p304 = scmp.ne.s32.totalorder %s296, %s298
      %p305 = scmp.eq.s32.totalorder %s42, 1
      %p306 = por %p304, %p305
      %p307 = scmp.ne.s32.totalorder %s298, %s299
      %p308 = scmp.eq.s32.totalorder %s42, 0
      %p309 = por %p307, %p308
      %p310 = scmp.ne.s32.totalorder %s298, %s299
      %p311 = scmp.eq.s32.totalorder %s43, 1
      %p312 = por %p310, %p311
      %p314 = scmp.ne.s32.totalorder %s299, %s313
      %p315 = scmp.eq.s32.totalorder %s43, 0
      %p316 = por %p314, %p315
      %s317 = ssub.s32 %s37, %s44
      %p318 = scmp.eq.s32.totalorder %s317, 0
      %s320 = sadd.s32 %s319, 1
      %s321 = scalar_select %p318, %s319, %s320
      %p324 = pneg %p318
      %p325 = scmp.eq.s32.totalorder %s37, 1
      %p326 = por %p324, %p325
      %p327 = scmp.ne.s32.totalorder %s319, %s322
      %p328 = scmp.eq.s32.totalorder %s37, 0
      %p329 = por %p327, %p328
      %p330 = scmp.ne.s32.totalorder %s319, %s322
      %p331 = scmp.eq.s32.totalorder %s42, 1
      %p332 = por %p330, %p331
      %p333 = scmp.ne.s32.totalorder %s322, %s323
      %p334 = scmp.eq.s32.totalorder %s42, 0
      %p335 = por %p333, %p334
      %p336 = scmp.ne.s32.totalorder %s322, %s323
      %p337 = scmp.eq.s32.totalorder %s43, 1
      %p338 = por %p336, %p337
      %p340 = scmp.ne.s32.totalorder %s323, %s339
      %p341 = scmp.eq.s32.totalorder %s43, 0
      %p342 = por %p340, %p341
      %s343 = ssub.s32 %s37, %s44
      %p344 = scmp.eq.s32.totalorder %s343, 0
      %s346 = sadd.s32 %s345, 1
      %s347 = scalar_select %p344, %s345, %s346
      %p350 = pneg %p344
      %p351 = scmp.eq.s32.totalorder %s37, 1
      %p352 = por %p350, %p351
      %p353 = scmp.ne.s32.totalorder %s345, %s348
      %p354 = scmp.eq.s32.totalorder %s37, 0
      %p355 = por %p353, %p354
      %p356 = scmp.ne.s32.totalorder %s345, %s348
      %p357 = scmp.eq.s32.totalorder %s42, 1
      %p358 = por %p356, %p357
      %p359 = scmp.ne.s32.totalorder %s348, %s349
      %p360 = scmp.eq.s32.totalorder %s42, 0
      %p361 = por %p359, %p360
      %p362 = scmp.ne.s32.totalorder %s348, %s349
      %p363 = scmp.eq.s32.totalorder %s43, 1
      %p364 = por %p362, %p363
      %p366 = scmp.ne.s32.totalorder %s349, %s365
      %p367 = scmp.eq.s32.totalorder %s43, 0
      %p368 = por %p366, %p367
      %p369 = scmp.le.s32.totalorder 1, %s37
      %p370 = scmp.lt.s32.totalorder %s37, 3
      %p371 = pnand %p369, %p370
      %p372 = pneg %p371
      // Predicated region
      $region9: #{tpu_custom_call.1} parent=5 // pred_check
        _
      $region10: #{tpu_custom_call.1} parent=5 // pred_check_branch
        %374 = sbr.rel (%p371) target = $region12
      $region11: #{tpu_custom_call.1} parent=5 // pred_region
        %s375 = ssub.s32 %s37, 1
        // Predicated region
        $region13: #{tpu_custom_call.1} parent=11 // pred_check
          %p376 = pneg %p162
        $region14: #{tpu_custom_call.1} parent=11 // pred_check_branch
          %378 = sbr.rel (%p376) target = $region16
        $region15: #{tpu_custom_call.1} parent=11 // pred_region
          %s380 = ssub.s32 1024, 1024
          %381 = vsyncadd [#allocation9], %s380
          %s382 = sshll.u32 [#allocation10], 4
          %s383 = int_to_ptr.vmem [resolvable:$true] %s382
          %388 = dma.hbm_to_vmem [thread:$0]  %s4, 1024, %s383, [#allocation9], 64, 64, 4
        $region16: #{tpu_custom_call.1} parent=11 // pred_fallthru
          _
        // Predicated region
        $region17: #{tpu_custom_call.1} parent=11 // pred_check
          %p389 = pneg %p183
        $region18: #{tpu_custom_call.1} parent=11 // pred_check_branch
          %391 = sbr.rel (%p389) target = $region20
        $region19: #{tpu_custom_call.1} parent=11 // pred_region
          _
        $region20: #{tpu_custom_call.1} parent=11 // pred_fallthru
          _
        // Predicated region
        $region21: #{tpu_custom_call.1} parent=11 // pred_check
          %p392 = pneg %p204
        $region22: #{tpu_custom_call.1} parent=11 // pred_check_branch
          %394 = sbr.rel (%p392) target = $region24
        $region23: #{tpu_custom_call.1} parent=11 // pred_region
          %s396 = ssub.s32 1024, 1024
          %397 = vsyncadd [#allocation12], %s396
          %s398 = sshll.u32 [#allocation11], 4
          %s399 = int_to_ptr.vmem [resolvable:$true] %s398
          %404 = dma.hbm_to_vmem [thread:$0]  %s6, 1024, %s399, [#allocation12], 64, 64, 4
        $region24: #{tpu_custom_call.1} parent=11 // pred_fallthru
          _
        // Predicated region
        $region25: #{tpu_custom_call.1} parent=11 // pred_check
          %p405 = pneg %p225
        $region26: #{tpu_custom_call.1} parent=11 // pred_check_branch
          %407 = sbr.rel (%p405) target = $region28
        $region27: #{tpu_custom_call.1} parent=11 // pred_region
          _
        $region28: #{tpu_custom_call.1} parent=11 // pred_fallthru
          _
        // Predicated region
        $region29: #{tpu_custom_call.1} parent=11 // pred_check
          %p408 = pneg %p246
        $region30: #{tpu_custom_call.1} parent=11 // pred_check_branch
          %410 = sbr.rel (%p408) target = $region32
        $region31: #{tpu_custom_call.1} parent=11 // pred_region
          %s412 = ssub.s32 1024, 1024
          %413 = vsyncadd [#allocation12], %s412
          %s414 = sshll.u32 [#allocation13], 4
          %s415 = int_to_ptr.vmem [resolvable:$true] %s414
          %420 = dma.hbm_to_vmem [thread:$0]  %s8, 1024, %s415, [#allocation12], 64, 64, 4
        $region32: #{tpu_custom_call.1} parent=11 // pred_fallthru
          _
        // Predicated region
        $region33: #{tpu_custom_call.1} parent=11 // pred_check
          %p421 = pneg %p267
        $region34: #{tpu_custom_call.1} parent=11 // pred_check_branch
          %423 = sbr.rel (%p421) target = $region36
        $region35: #{tpu_custom_call.1} parent=11 // pred_region
          _
        $region36: #{tpu_custom_call.1} parent=11 // pred_fallthru
          _
        // Predicated region
        $region37: #{tpu_custom_call.1} parent=11 // pred_check
          %p424 = pneg %p288
        $region38: #{tpu_custom_call.1} parent=11 // pred_check_branch
          %426 = sbr.rel (%p424) target = $region40
        $region39: #{tpu_custom_call.1} parent=11 // pred_region
          %s428 = ssub.s32 1024, 1024
          %429 = vsyncadd [#allocation15], %s428
          %s430 = sshll.u32 [#allocation14], 4
          %s431 = int_to_ptr.vmem [resolvable:$true] %s430
          %436 = dma.hbm_to_vmem [thread:$0]  %s10, 1024, %s431, [#allocation15], 64, 64, 4
        $region40: #{tpu_custom_call.1} parent=11 // pred_fallthru
          _
        // Predicated region
        $region41: #{tpu_custom_call.1} parent=11 // pred_check
          %p437 = pneg %p309
        $region42: #{tpu_custom_call.1} parent=11 // pred_check_branch
          %439 = sbr.rel (%p437) target = $region44
        $region43: #{tpu_custom_call.1} parent=11 // pred_region
          _
        $region44: #{tpu_custom_call.1} parent=11 // pred_fallthru
          _
      $region12: #{tpu_custom_call.1} parent=5 // pred_fallthru
        _
      %p440 = scmp.lt.s32.totalorder %s37, 2
      // Predicated region
      $region45: #{tpu_custom_call.1} parent=5 // pred_check
        %p441 = pneg %p440
      $region46: #{tpu_custom_call.1} parent=5 // pred_check_branch
        %443 = sbr.rel (%p441) target = $region48
      $region47: #{tpu_custom_call.1} parent=5 // pred_region
        // Predicated region
        $region49: #{tpu_custom_call.1} parent=47 // pred_check
          %p444 = pneg %p57
        $region50: #{tpu_custom_call.1} parent=47 // pred_check_branch
          %446 = sbr.rel (%p444) target = $region52
        $region51: #{tpu_custom_call.1} parent=47 // pred_region
          %s447 = sand.u32 %s47, 1
          %s448 = scalar_lea.sflag [#allocation3], %s447
          %s449 = sand.u32 %s47, 1
          %s450 = smul.addr %s449, 8
          %s451 = scalar_lea.vmem [#allocation2], %s450
          %s453 = ssub.s32 128, 128
          %454 = vsyncadd %s448, %s453
          %s455 = smul.addr %s37, 128
          %s456 = scalar_lea.hbm %s0, %s455
          %s458 = sshll.u32 %s451, 4
          %s459 = int_to_ptr.vmem [resolvable:$true] %s458
          %461 = dma.hbm_to_vmem [thread:$0]  %s456, 128, %s459, %s448
        $region52: #{tpu_custom_call.1} parent=47 // pred_fallthru
          _
        // Predicated region
        $region53: #{tpu_custom_call.1} parent=47 // pred_check
          %p462 = pneg %p83
        $region54: #{tpu_custom_call.1} parent=47 // pred_check_branch
          %464 = sbr.rel (%p462) target = $region56
        $region55: #{tpu_custom_call.1} parent=47 // pred_region
          %s465 = sand.u32 %s37, 1
          %s466 = scalar_lea.sflag [#allocation6], %s465
          %s467 = sand.u32 %s73, 1
          %s468 = smul.addr %s467, 8
          %s469 = scalar_lea.vmem [#allocation5], %s468
          %s471 = ssub.s32 128, 128
          %472 = vsyncadd %s466, %s471
          %s473 = smul.addr %s37, 128
          %s474 = scalar_lea.hbm %s1, %s473
          %s476 = sshll.u32 %s469, 4
          %s477 = int_to_ptr.vmem [resolvable:$true] %s476
          %479 = dma.hbm_to_vmem [thread:$0]  %s474, 128, %s477, %s466
        $region56: #{tpu_custom_call.1} parent=47 // pred_fallthru
          _
        // Predicated region
        $region57: #{tpu_custom_call.1} parent=47 // pred_check
          %p480 = pneg %p109
        $region58: #{tpu_custom_call.1} parent=47 // pred_check_branch
          %482 = sbr.rel (%p480) target = $region60
        $region59: #{tpu_custom_call.1} parent=47 // pred_region
          %s483 = sand.u32 %s37, 1
          %s484 = scalar_lea.sflag [#allocation6], %s483
          %s485 = sand.u32 %s99, 1
          %s486 = smul.addr %s485, 8
          %s487 = scalar_lea.vmem [#allocation7], %s486
          %s489 = ssub.s32 128, 128
          %490 = vsyncadd %s484, %s489
          %s491 = smul.addr %s37, 128
          %s492 = scalar_lea.hbm %s2, %s491
          %s494 = sshll.u32 %s487, 4
          %s495 = int_to_ptr.vmem [resolvable:$true] %s494
          %497 = dma.hbm_to_vmem [thread:$0]  %s492, 128, %s495, %s484
        $region60: #{tpu_custom_call.1} parent=47 // pred_fallthru
          _
        // Predicated region
        $region61: #{tpu_custom_call.1} parent=47 // pred_check
          %p498 = pneg %p135
        $region62: #{tpu_custom_call.1} parent=47 // pred_check_branch
          %500 = sbr.rel (%p498) target = $region64
        $region63: #{tpu_custom_call.1} parent=47 // pred_region
          %s501 = sand.u32 %s37, 1
          %s502 = scalar_lea.sflag [#allocation9], %s501
          %s503 = sand.u32 %s125, 1
          %s504 = smul.addr %s503, 8
          %s505 = scalar_lea.vmem [#allocation8], %s504
          %s507 = ssub.s32 128, 128
          %508 = vsyncadd %s502, %s507
          %s509 = smul.addr %s37, 128
          %s510 = scalar_lea.hbm %s3, %s509
          %s512 = sshll.u32 %s505, 4
          %s513 = int_to_ptr.vmem [resolvable:$true] %s512
          %515 = dma.hbm_to_vmem [thread:$0]  %s510, 128, %s513, %s502
        $region64: #{tpu_custom_call.1} parent=47 // pred_fallthru
          _
      $region48: #{tpu_custom_call.1} parent=5 // pred_fallthru
        _
      %p516 = scmp.le.s32.totalorder 1, %s37
      %p517 = scmp.lt.s32.totalorder %s37, 3
      %p518 = pnand %p516, %p517
      %p519 = pneg %p518
      // Predicated region
      $region65: #{tpu_custom_call.1} parent=5 // pred_check
        _
      $region66: #{tpu_custom_call.1} parent=5 // pred_check_branch
        %521 = sbr.rel (%p518) target = $region68
      $region67: #{tpu_custom_call.1} parent=5 // pred_region
        %s522 = ssub.s32 %s37, 1
        %s523 = sand.u32 %s50, 1
        %s524 = scalar_lea.sflag [#allocation3], %s523
        %s525 = sand.u32 %s50, 1
        %s526 = smul.addr %s525, 8
        %s527 = scalar_lea.vmem [#allocation2], %s526
        // Predicated region
        $region69: #{tpu_custom_call.1} parent=67 // pred_check
          %p528 = pneg %p63
        $region70: #{tpu_custom_call.1} parent=67 // pred_check_branch
          %530 = sbr.rel (%p528) target = $region72
        $region71: #{tpu_custom_call.1} parent=67 // pred_region
          %531 = dma.done %s524, 128
        $region72: #{tpu_custom_call.1} parent=67 // pred_fallthru
          _
        %s532 = sand.u32 %s42, 1
        %s533 = scalar_lea.sflag [#allocation6], %s532
        %s534 = sand.u32 %s76, 1
        %s535 = smul.addr %s534, 8
        %s536 = scalar_lea.vmem [#allocation5], %s535
        // Predicated region
        $region73: #{tpu_custom_call.1} parent=67 // pred_check
          %p537 = pneg %p89
        $region74: #{tpu_custom_call.1} parent=67 // pred_check_branch
          %539 = sbr.rel (%p537) target = $region76
        $region75: #{tpu_custom_call.1} parent=67 // pred_region
          %540 = dma.done %s533, 128
        $region76: #{tpu_custom_call.1} parent=67 // pred_fallthru
          _
        %s541 = sand.u32 %s42, 1
        %s542 = scalar_lea.sflag [#allocation6], %s541
        %s543 = sand.u32 %s102, 1
        %s544 = smul.addr %s543, 8
        %s545 = scalar_lea.vmem [#allocation7], %s544
        // Predicated region
        $region77: #{tpu_custom_call.1} parent=67 // pred_check
          %p546 = pneg %p115
        $region78: #{tpu_custom_call.1} parent=67 // pred_check_branch
          %548 = sbr.rel (%p546) target = $region80
        $region79: #{tpu_custom_call.1} parent=67 // pred_region
          %549 = dma.done %s542, 128
        $region80: #{tpu_custom_call.1} parent=67 // pred_fallthru
          _
        %s550 = sand.u32 %s42, 1
        %s551 = scalar_lea.sflag [#allocation9], %s550
        %s552 = sand.u32 %s128, 1
        %s553 = smul.addr %s552, 8
        %s554 = scalar_lea.vmem [#allocation8], %s553
        // Predicated region
        $region81: #{tpu_custom_call.1} parent=67 // pred_check
          %p555 = pneg %p141
        $region82: #{tpu_custom_call.1} parent=67 // pred_check_branch
          %557 = sbr.rel (%p555) target = $region84
        $region83: #{tpu_custom_call.1} parent=67 // pred_region
          %558 = dma.done %s551, 128
        $region84: #{tpu_custom_call.1} parent=67 // pred_fallthru
          _
        // Predicated region
        $region85: #{tpu_custom_call.1} parent=67 // pred_check
          %p559 = pneg %p162
        $region86: #{tpu_custom_call.1} parent=67 // pred_check_branch
          %561 = sbr.rel (%p559) target = $region88
        $region87: #{tpu_custom_call.1} parent=67 // pred_region
          %562 = dma.done [#allocation9], 1024
        $region88: #{tpu_custom_call.1} parent=67 // pred_fallthru
          _
        // Predicated region
        $region89: #{tpu_custom_call.1} parent=67 // pred_check
          %p563 = pneg %p204
        $region90: #{tpu_custom_call.1} parent=67 // pred_check_branch
          %565 = sbr.rel (%p563) target = $region92
        $region91: #{tpu_custom_call.1} parent=67 // pred_region
          %566 = dma.done [#allocation12], 1024
        $region92: #{tpu_custom_call.1} parent=67 // pred_fallthru
          _
        // Predicated region
        $region93: #{tpu_custom_call.1} parent=67 // pred_check
          %p567 = pneg %p246
        $region94: #{tpu_custom_call.1} parent=67 // pred_check_branch
          %569 = sbr.rel (%p567) target = $region96
        $region95: #{tpu_custom_call.1} parent=67 // pred_region
          %570 = dma.done [#allocation12], 1024
        $region96: #{tpu_custom_call.1} parent=67 // pred_fallthru
          _
        // Predicated region
        $region97: #{tpu_custom_call.1} parent=67 // pred_check
          %p571 = pneg %p288
        $region98: #{tpu_custom_call.1} parent=67 // pred_check_branch
          %573 = sbr.rel (%p571) target = $region100
        $region99: #{tpu_custom_call.1} parent=67 // pred_region
          %574 = dma.done [#allocation15], 1024
        $region100: #{tpu_custom_call.1} parent=67 // pred_fallthru
          _
        %s575 = sand.u32 %s50, 1
        %s576 = scalar_lea.sflag [#allocation3], %s575
        %s577 = sand.u32 %s50, 1
        %s578 = smul.addr %s577, 8
        %s579 = scalar_lea.vmem [#allocation2], %s578
        %p580 = pneg %p63
        %p581 = pneg %p60
        %s582 = sand.u32 %s42, 1
        %s583 = scalar_lea.sflag [#allocation6], %s582
        %s584 = sand.u32 %s76, 1
        %s585 = smul.addr %s584, 8
        %s586 = scalar_lea.vmem [#allocation5], %s585
        %p587 = pneg %p89
        %p588 = pneg %p86
        %s589 = sand.u32 %s42, 1
        %s590 = scalar_lea.sflag [#allocation6], %s589
        %s591 = sand.u32 %s102, 1
        %s592 = smul.addr %s591, 8
        %s593 = scalar_lea.vmem [#allocation7], %s592
        %p594 = pneg %p115
        %p595 = pneg %p112
        %s596 = sand.u32 %s42, 1
        %s597 = scalar_lea.sflag [#allocation9], %s596
        %s598 = sand.u32 %s128, 1
        %s599 = smul.addr %s598, 8
        %s600 = scalar_lea.vmem [#allocation8], %s599
        %p601 = pneg %p141
        %p602 = pneg %p138
        %p603 = pneg %p162
        %p604 = pneg %p159
        %p605 = pneg %p183
        %p606 = pneg %p180
        %p607 = pneg %p204
        %p608 = pneg %p201
        %p609 = pneg %p225
        %p610 = pneg %p222
        %p611 = pneg %p246
        %p612 = pneg %p243
        %p613 = pneg %p267
        %p614 = pneg %p264
        %p615 = pneg %p288
        %p616 = pneg %p285
        %p617 = pneg %p309
        %p618 = pneg %p306
        %p619 = pneg %p335
        %p620 = pneg %p332
        %s621 = sand.u32 %s322, 1
        %s622 = scalar_lea.sflag [#allocation4], %s621
        %s623 = sand.u32 %s322, 1
        %s624 = smul.addr %s623, 8
        %s625 = scalar_lea.vmem [#allocation16], %s624
        %p626 = pneg %p361
        %p627 = pneg %p358
        %s628 = sand.u32 %s348, 1
        %s629 = scalar_lea.sflag [#allocation18], %s628
        %s630 = sand.u32 %s348, 1
        %s631 = smul.addr %s630, 32
        %s632 = scalar_lea.vmem [#allocation17], %s631
        %v634 = vld [vmem:[%s527] sm:$0xff]
        %v635 = vpack.c.bf16 %v634, %v634
        %v636 = vld [vmem:[%s536] sm:$0xff]
        %v637 = vpack.c.bf16 %v636, %v636
        %v638 = vld [vmem:[%s545] sm:$0xff]
        %v639 = vpack.c.bf16 %v638, %v638
        %v640 = vld [vmem:[#allocation10] sm:$0xf]
        %v641 = vld [vmem:[#allocation10 + $0x4] sm:$0xf]
        %v642 = vld [vmem:[#allocation10 + $0x8] sm:$0xf]
        %v643 = vld [vmem:[#allocation10 + $0xc] sm:$0xf]
        %v644 = vld [vmem:[#allocation10 + $0x10] sm:$0xf]
        %v645 = vld [vmem:[#allocation10 + $0x14] sm:$0xf]
        %v646 = vld [vmem:[#allocation10 + $0x18] sm:$0xf]
        %v647 = vld [vmem:[#allocation10 + $0x1c] sm:$0xf]
        %v648 = vld [vmem:[#allocation10 + $0x20] sm:$0xf]
        %v649 = vld [vmem:[#allocation10 + $0x24] sm:$0xf]
        %v650 = vld [vmem:[#allocation10 + $0x28] sm:$0xf]
        %v651 = vld [vmem:[#allocation10 + $0x2c] sm:$0xf]
        %v652 = vld [vmem:[#allocation10 + $0x30] sm:$0xf]
        %v653 = vld [vmem:[#allocation10 + $0x34] sm:$0xf]
        %v654 = vld [vmem:[#allocation10 + $0x38] sm:$0xf]
        %v655 = vld [vmem:[#allocation10 + $0x3c] sm:$0xf]
        %v656 = vld [vmem:[%s5] sm:$0x1]
        %v658 = vlaneseq
        %v659 = vshrl.u32 %v658, 7
        %v660 = vsub.s32 0, %v659
        %v661 = vrot.slane %v656, %v660
        %v679 = vunpack.c.l.b16 %v640
        %v680 = vunpack.c.l.b16 %v641
        %v681 = vunpack.c.l.b16 %v642
        %v682 = vunpack.c.l.b16 %v643
        %v683 = vunpack.c.l.b16 %v644
        %v684 = vunpack.c.l.b16 %v645
        %v685 = vunpack.c.l.b16 %v646
        %v686 = vunpack.c.l.b16 %v647
        %v687 = vunpack.c.l.b16 %v648
        %v688 = vunpack.c.l.b16 %v649
        %v689 = vunpack.c.l.b16 %v650
        %v690 = vunpack.c.l.b16 %v651
        %v691 = vunpack.c.l.b16 %v652
        %v692 = vunpack.c.l.b16 %v653
        %v693 = vunpack.c.l.b16 %v654
        %v694 = vunpack.c.l.b16 %v655
        %v695 = vpack.c.b16 %v680, %v679
        %v696 = vpack.c.b16 %v682, %v681
        %v697 = vpack.c.b16 %v684, %v683
        %v698 = vpack.c.b16 %v686, %v685
        %v699 = vpack.c.b16 %v688, %v687
        %v700 = vpack.c.b16 %v690, %v689
        %v701 = vpack.c.b16 %v692, %v691
        %v702 = vpack.c.b16 %v694, %v693
        %711 = vmatprep.subr.bf16.mxu0 0
        %712 = vmatpush1.bf16.msra.mxu0 %v702
        %713 = vmatprep.subr.bf16.mxu0 0
        %714 = vmatpush1.bf16.msra.mxu0 %v701
        %715 = vmatprep.subr.bf16.mxu0 0
        %716 = vmatpush1.bf16.msra.mxu0 %v700
        %717 = vmatprep.subr.bf16.mxu0 0
        %718 = vmatpush1.bf16.msra.mxu0 %v699
        %719 = vmatprep.subr.bf16.mxu0 0
        %720 = vmatpush1.bf16.msra.mxu0 %v698
        %721 = vmatprep.subr.bf16.mxu0 0
        %722 = vmatpush1.bf16.msra.mxu0 %v697
        %723 = vmatprep.subr.bf16.mxu0 0
        %724 = vmatpush1.bf16.msra.mxu0 %v696
        %725 = vmatprep.subr.bf16.mxu0 0
        %726 = vmatpush1.bf16.msra.mxu0 %v695
        %727 = vmatprep.subr.bf16.mxu0 0
        %728 = vmatpush2.bf16.msra.mxu0 0
        %729 = vmatprep.subr.bf16.mxu0 0
        %730 = vmatpush2.bf16.msra.mxu0 0
        %731 = vmatprep.subr.bf16.mxu0 0
        %732 = vmatpush2.bf16.msra.mxu0 0
        %733 = vmatprep.subr.bf16.mxu0 0
        %734 = vmatpush2.bf16.msra.mxu0 0
        %735 = vmatprep.subr.bf16.mxu0 0
        %736 = vmatpush2.bf16.msra.mxu0 0
        %737 = vmatprep.subr.bf16.mxu0 0
        %738 = vmatpush2.bf16.msra.mxu0 0
        %739 = vmatprep.subr.bf16.mxu0 0
        %740 = vmatpush2.bf16.msra.mxu0 0
        %741 = vmatprep.subr.bf16.mxu0 0
        %742 = vmatpush2.bf16.msra.mxu0 0
        %743 = vmatprep.mubr.bf16.mxu0 0
        %744 = vmatmul.mubr.bf16.gmra.mxu0 %v635
        %v745 = vpop.f32.mrf.mxu0
        %v746 = vadd.f32 %v661, %v745
        %v747 = vpop.f32.mrf.mxu0
        %v748 = vpop.f32.mrf.mxu0
        %v749 = vpop.f32.mrf.mxu0
        %750 = vdwg.mxu0
        %v751 = vld [vmem:[#allocation11] sm:$0xf]
        %v752 = vld [vmem:[#allocation11 + $0x4] sm:$0xf]
        %v753 = vld [vmem:[#allocation11 + $0x8] sm:$0xf]
        %v754 = vld [vmem:[#allocation11 + $0xc] sm:$0xf]
        %v755 = vld [vmem:[#allocation11 + $0x10] sm:$0xf]
        %v756 = vld [vmem:[#allocation11 + $0x14] sm:$0xf]
        %v757 = vld [vmem:[#allocation11 + $0x18] sm:$0xf]
        %v758 = vld [vmem:[#allocation11 + $0x1c] sm:$0xf]
        %v759 = vld [vmem:[#allocation11 + $0x20] sm:$0xf]
        %v760 = vld [vmem:[#allocation11 + $0x24] sm:$0xf]
        %v761 = vld [vmem:[#allocation11 + $0x28] sm:$0xf]
        %v762 = vld [vmem:[#allocation11 + $0x2c] sm:$0xf]
        %v763 = vld [vmem:[#allocation11 + $0x30] sm:$0xf]
        %v764 = vld [vmem:[#allocation11 + $0x34] sm:$0xf]
        %v765 = vld [vmem:[#allocation11 + $0x38] sm:$0xf]
        %v766 = vld [vmem:[#allocation11 + $0x3c] sm:$0xf]
        %v767 = vld [vmem:[%s7] sm:$0x1]
        %v769 = vlaneseq
        %v770 = vshrl.u32 %v769, 7
        %v771 = vsub.s32 0, %v770
        %v772 = vrot.slane %v767, %v771
        %v790 = vunpack.c.l.b16 %v751
        %v791 = vunpack.c.l.b16 %v752
        %v792 = vunpack.c.l.b16 %v753
        %v793 = vunpack.c.l.b16 %v754
        %v794 = vunpack.c.l.b16 %v755
        %v795 = vunpack.c.l.b16 %v756
        %v796 = vunpack.c.l.b16 %v757
        %v797 = vunpack.c.l.b16 %v758
        %v798 = vunpack.c.l.b16 %v759
        %v799 = vunpack.c.l.b16 %v760
        %v800 = vunpack.c.l.b16 %v761
        %v801 = vunpack.c.l.b16 %v762
        %v802 = vunpack.c.l.b16 %v763
        %v803 = vunpack.c.l.b16 %v764
        %v804 = vunpack.c.l.b16 %v765
        %v805 = vunpack.c.l.b16 %v766
        %v806 = vpack.c.b16 %v791, %v790
        %v807 = vpack.c.b16 %v793, %v792
        %v808 = vpack.c.b16 %v795, %v794
        %v809 = vpack.c.b16 %v797, %v796
        %v810 = vpack.c.b16 %v799, %v798
        %v811 = vpack.c.b16 %v801, %v800
        %v812 = vpack.c.b16 %v803, %v802
        %v813 = vpack.c.b16 %v805, %v804
        %822 = vmatprep.subr.bf16.mxu0 0
        %823 = vmatpush1.bf16.msra.mxu0 %v813
        %824 = vmatprep.subr.bf16.mxu0 0
        %825 = vmatpush1.bf16.msra.mxu0 %v812
        %826 = vmatprep.subr.bf16.mxu0 0
        %827 = vmatpush1.bf16.msra.mxu0 %v811
        %828 = vmatprep.subr.bf16.mxu0 0
        %829 = vmatpush1.bf16.msra.mxu0 %v810
        %830 = vmatprep.subr.bf16.mxu0 0
        %831 = vmatpush1.bf16.msra.mxu0 %v809
        %832 = vmatprep.subr.bf16.mxu0 0
        %833 = vmatpush1.bf16.msra.mxu0 %v808
        %834 = vmatprep.subr.bf16.mxu0 0
        %835 = vmatpush1.bf16.msra.mxu0 %v807
        %836 = vmatprep.subr.bf16.mxu0 0
        %837 = vmatpush1.bf16.msra.mxu0 %v806
        %838 = vmatprep.subr.bf16.mxu0 0
        %839 = vmatpush2.bf16.msra.mxu0 0
        %840 = vmatprep.subr.bf16.mxu0 0
        %841 = vmatpush2.bf16.msra.mxu0 0
        %842 = vmatprep.subr.bf16.mxu0 0
        %843 = vmatpush2.bf16.msra.mxu0 0
        %844 = vmatprep.subr.bf16.mxu0 0
        %845 = vmatpush2.bf16.msra.mxu0 0
        %846 = vmatprep.subr.bf16.mxu0 0
        %847 = vmatpush2.bf16.msra.mxu0 0
        %848 = vmatprep.subr.bf16.mxu0 0
        %849 = vmatpush2.bf16.msra.mxu0 0
        %850 = vmatprep.subr.bf16.mxu0 0
        %851 = vmatpush2.bf16.msra.mxu0 0
        %852 = vmatprep.subr.bf16.mxu0 0
        %853 = vmatpush2.bf16.msra.mxu0 0
        %854 = vmatprep.mubr.bf16.mxu0 0
        %855 = vmatmul.mubr.bf16.gmra.mxu0 %v637
        %v856 = vpop.f32.mrf.mxu0
        %v857 = vadd.f32 %v772, %v856
        %v858 = vpop.f32.mrf.mxu0
        %v859 = vpop.f32.mrf.mxu0
        %v860 = vpop.f32.mrf.mxu0
        %861 = vdwg.mxu0
        %v862 = vld [vmem:[#allocation13] sm:$0xf]
        %v863 = vld [vmem:[#allocation13 + $0x4] sm:$0xf]
        %v864 = vld [vmem:[#allocation13 + $0x8] sm:$0xf]
        %v865 = vld [vmem:[#allocation13 + $0xc] sm:$0xf]
        %v866 = vld [vmem:[#allocation13 + $0x10] sm:$0xf]
        %v867 = vld [vmem:[#allocation13 + $0x14] sm:$0xf]
        %v868 = vld [vmem:[#allocation13 + $0x18] sm:$0xf]
        %v869 = vld [vmem:[#allocation13 + $0x1c] sm:$0xf]
        %v870 = vld [vmem:[#allocation13 + $0x20] sm:$0xf]
        %v871 = vld [vmem:[#allocation13 + $0x24] sm:$0xf]
        %v872 = vld [vmem:[#allocation13 + $0x28] sm:$0xf]
        %v873 = vld [vmem:[#allocation13 + $0x2c] sm:$0xf]
        %v874 = vld [vmem:[#allocation13 + $0x30] sm:$0xf]
        %v875 = vld [vmem:[#allocation13 + $0x34] sm:$0xf]
        %v876 = vld [vmem:[#allocation13 + $0x38] sm:$0xf]
        %v877 = vld [vmem:[#allocation13 + $0x3c] sm:$0xf]
        %v878 = vld [vmem:[%s9] sm:$0x1]
        %v880 = vlaneseq
        %v881 = vshrl.u32 %v880, 7
        %v882 = vsub.s32 0, %v881
        %v883 = vrot.slane %v878, %v882
        %v901 = vunpack.c.l.b16 %v862
        %v902 = vunpack.c.l.b16 %v863
        %v903 = vunpack.c.l.b16 %v864
        %v904 = vunpack.c.l.b16 %v865
        %v905 = vunpack.c.l.b16 %v866
        %v906 = vunpack.c.l.b16 %v867
        %v907 = vunpack.c.l.b16 %v868
        %v908 = vunpack.c.l.b16 %v869
        %v909 = vunpack.c.l.b16 %v870
        %v910 = vunpack.c.l.b16 %v871
        %v911 = vunpack.c.l.b16 %v872
        %v912 = vunpack.c.l.b16 %v873
        %v913 = vunpack.c.l.b16 %v874
        %v914 = vunpack.c.l.b16 %v875
        %v915 = vunpack.c.l.b16 %v876
        %v916 = vunpack.c.l.b16 %v877
        %v917 = vpack.c.b16 %v902, %v901
        %v918 = vpack.c.b16 %v904, %v903
        %v919 = vpack.c.b16 %v906, %v905
        %v920 = vpack.c.b16 %v908, %v907
        %v921 = vpack.c.b16 %v910, %v909
        %v922 = vpack.c.b16 %v912, %v911
        %v923 = vpack.c.b16 %v914, %v913
        %v924 = vpack.c.b16 %v916, %v915
        %933 = vmatprep.subr.bf16.mxu0 0
        %934 = vmatpush1.bf16.msra.mxu0 %v924
        %935 = vmatprep.subr.bf16.mxu0 0
        %936 = vmatpush1.bf16.msra.mxu0 %v923
        %937 = vmatprep.subr.bf16.mxu0 0
        %938 = vmatpush1.bf16.msra.mxu0 %v922
        %939 = vmatprep.subr.bf16.mxu0 0
        %940 = vmatpush1.bf16.msra.mxu0 %v921
        %941 = vmatprep.subr.bf16.mxu0 0
        %942 = vmatpush1.bf16.msra.mxu0 %v920
        %943 = vmatprep.subr.bf16.mxu0 0
        %944 = vmatpush1.bf16.msra.mxu0 %v919
        %945 = vmatprep.subr.bf16.mxu0 0
        %946 = vmatpush1.bf16.msra.mxu0 %v918
        %947 = vmatprep.subr.bf16.mxu0 0
        %948 = vmatpush1.bf16.msra.mxu0 %v917
        %949 = vmatprep.subr.bf16.mxu0 0
        %950 = vmatpush2.bf16.msra.mxu0 0
        %951 = vmatprep.subr.bf16.mxu0 0
        %952 = vmatpush2.bf16.msra.mxu0 0
        %953 = vmatprep.subr.bf16.mxu0 0
        %954 = vmatpush2.bf16.msra.mxu0 0
        %955 = vmatprep.subr.bf16.mxu0 0
        %956 = vmatpush2.bf16.msra.mxu0 0
        %957 = vmatprep.subr.bf16.mxu0 0
        %958 = vmatpush2.bf16.msra.mxu0 0
        %959 = vmatprep.subr.bf16.mxu0 0
        %960 = vmatpush2.bf16.msra.mxu0 0
        %961 = vmatprep.subr.bf16.mxu0 0
        %962 = vmatpush2.bf16.msra.mxu0 0
        %963 = vmatprep.subr.bf16.mxu0 0
        %964 = vmatpush2.bf16.msra.mxu0 0
        %965 = vmatprep.mubr.bf16.mxu0 0
        %966 = vmatmul.mubr.bf16.gmra.mxu0 %v639
        %v967 = vpop.f32.mrf.mxu0
        %v968 = vadd.f32 %v883, %v967
        %v969 = vpop.f32.mrf.mxu0
        %v970 = vpop.f32.mrf.mxu0
        %v971 = vpop.f32.mrf.mxu0
        %972 = vdwg.mxu0
        %v973 = vld [vmem:[%s554] sm:$0xff]
        %vm974 = vcmp.ne.s32.totalorder %v973, 0
        %v975 = vld [vmem:[%s11] sm:$0x1]
        %v977 = vlaneseq
        %v978 = vshrl.u32 %v977, 7
        %v979 = vsub.s32 0, %v978
        %v980 = vrot.slane %v975, %v979
        %v982 = vpack.c.bf16 %v746, %v746
        %v983 = vpack.c.bf16 %v857, %v857
        %v984 = vpack.c.bf16 %v968, %v968
        %vm985 = vcmask 261120
        %v987 = vsel %vm985, %v982, 0
        %v990 = vsel %vm985, %v983, 0
        %992 = vmatprep.subr.bf16.mxu0 0
        %993 = vmatpush1.bf16.xpose.msra.mxu0 0
        %994 = vmatprep.subr.bf16.mxu0 0
        %995 = vmatpush1.bf16.xpose.msra.mxu0 0
        %996 = vmatprep.subr.bf16.mxu0 0
        %997 = vmatpush1.bf16.xpose.msra.mxu0 0
        %998 = vmatprep.subr.bf16.mxu0 0
        %999 = vmatpush1.bf16.xpose.msra.mxu0 0
        %1000 = vmatprep.subr.bf16.mxu0 0
        %1001 = vmatpush1.bf16.xpose.msra.mxu0 0
        %1002 = vmatprep.subr.bf16.mxu0 0
        %1003 = vmatpush1.bf16.xpose.msra.mxu0 0
        %1004 = vmatprep.subr.bf16.mxu0 0
        %1005 = vmatpush1.bf16.xpose.msra.mxu0 0
        %1006 = vmatprep.subr.bf16.mxu0 0
        %1007 = vmatpush1.bf16.xpose.msra.mxu0 %v990
        %1008 = vmatprep.subr.bf16.mxu0 0
        %1009 = vmatpush2.bf16.xpose.msra.mxu0 0
        %1010 = vmatprep.subr.bf16.mxu0 0
        %1011 = vmatpush2.bf16.xpose.msra.mxu0 0
        %1012 = vmatprep.subr.bf16.mxu0 0
        %1013 = vmatpush2.bf16.xpose.msra.mxu0 0
        %1014 = vmatprep.subr.bf16.mxu0 0
        %1015 = vmatpush2.bf16.xpose.msra.mxu0 0
        %1016 = vmatprep.subr.bf16.mxu0 0
        %1017 = vmatpush2.bf16.xpose.msra.mxu0 0
        %1018 = vmatprep.subr.bf16.mxu0 0
        %1019 = vmatpush2.bf16.xpose.msra.mxu0 0
        %1020 = vmatprep.subr.bf16.mxu0 0
        %1021 = vmatpush2.bf16.xpose.msra.mxu0 0
        %1022 = vmatprep.subr.bf16.mxu0 0
        %1023 = vmatpush2.bf16.xpose.msra.mxu0 0
        %1024 = vmatprep.mubr.bf16.mxu0 0
        %1025 = vmatmul.mubr.bf16.gmra.mxu0 %v987
        %v1026 = vpop.f32.mrf.mxu0
        %v1027 = vadd.f32 0.0, %v1026
        %v1028 = vpop.f32.mrf.mxu0
        %v1029 = vpop.f32.mrf.mxu0
        %v1030 = vpop.f32.mrf.mxu0
        %1031 = vdwg.mxu0
        %v1032 = vsel %vm974, -1e+09, %v1027
        %vm1033 = vcmask 64512
        %v1034 = vsel %vm1033, %v1032, -inf
        %1035 = vmax.xlane.f32.xlu0 %v1034
        %v1036 = vpop.xlane.xlu0 %1035
        %v1037 = vsub.f32 %v1032, %v1036
        %v1038 = vmul.f32 %v1037, 1.442695
        %v1039 = vpow.pop %v1038
        %v1040 = vsel %vm1033, %v1039, 0.0
        %1041 = vadd.xlane.f32.xlu0 %v1040
        %v1042 = vpop.xlane.xlu0 %1041
        %v1043 = vrcp.pop %v1042
        %v1044 = vmul.f32 %v1039, %v1043
        %1045 = vst.msk [vmem:[%s632] sm:$0xff] %vm1033, %v1044
        %v1046 = vpack.c.bf16 %v1044, %v1044
        %v1048 = vsel %vm1033, %v1046, 0
        %vm1050 = vcmask 1043456
        %v1052 = vsel %vm1050, %v984, 0
        %1054 = vmatprep.subr.bf16.mxu0 0
        %1055 = vmatpush1.bf16.msra.mxu0 0
        %1056 = vmatprep.subr.bf16.mxu0 0
        %1057 = vmatpush1.bf16.msra.mxu0 0
        %1058 = vmatprep.subr.bf16.mxu0 0
        %1059 = vmatpush1.bf16.msra.mxu0 0
        %1060 = vmatprep.subr.bf16.mxu0 0
        %1061 = vmatpush1.bf16.msra.mxu0 0
        %1062 = vmatprep.subr.bf16.mxu0 0
        %1063 = vmatpush1.bf16.msra.mxu0 0
        %1064 = vmatprep.subr.bf16.mxu0 0
        %1065 = vmatpush1.bf16.msra.mxu0 0
        %1066 = vmatprep.subr.bf16.mxu0 0
        %1067 = vmatpush1.bf16.msra.mxu0 0
        %1068 = vmatprep.subr.bf16.mxu0 0
        %1069 = vmatpush1.bf16.msra.mxu0 %v1052
        %1070 = vmatprep.subr.bf16.mxu0 0
        %1071 = vmatpush2.bf16.msra.mxu0 0
        %1072 = vmatprep.subr.bf16.mxu0 0
        %1073 = vmatpush2.bf16.msra.mxu0 0
        %1074 = vmatprep.subr.bf16.mxu0 0
        %1075 = vmatpush2.bf16.msra.mxu0 0
        %1076 = vmatprep.subr.bf16.mxu0 0
        %1077 = vmatpush2.bf16.msra.mxu0 0
        %1078 = vmatprep.subr.bf16.mxu0 0
        %1079 = vmatpush2.bf16.msra.mxu0 0
        %1080 = vmatprep.subr.bf16.mxu0 0
        %1081 = vmatpush2.bf16.msra.mxu0 0
        %1082 = vmatprep.subr.bf16.mxu0 0
        %1083 = vmatpush2.bf16.msra.mxu0 0
        %1084 = vmatprep.subr.bf16.mxu0 0
        %1085 = vmatpush2.bf16.msra.mxu0 0
        %1086 = vmatprep.mubr.bf16.mxu0 0
        %1087 = vmatmul.mubr.bf16.gmra.mxu0 %v1048
        %v1088 = vpop.f32.mrf.mxu0
        %v1089 = vadd.f32 0.0, %v1088
        %v1090 = vpop.f32.mrf.mxu0
        %v1091 = vpop.f32.mrf.mxu0
        %v1092 = vpop.f32.mrf.mxu0
        %1093 = vdwg.mxu0
        %v1094 = vpack.c.bf16 %v1089, %v1089
        %v1095 = vld [vmem:[#allocation14] sm:$0xf]
        %v1096 = vld [vmem:[#allocation14 + $0x4] sm:$0xf]
        %v1097 = vld [vmem:[#allocation14 + $0x8] sm:$0xf]
        %v1098 = vld [vmem:[#allocation14 + $0xc] sm:$0xf]
        %v1103 = vunpack.c.l.b16 %v1095
        %v1104 = vunpack.c.l.b16 %v1096
        %v1105 = vunpack.c.l.b16 %v1097
        %v1106 = vunpack.c.l.b16 %v1098
        %v1107 = vpack.c.b16 %v1104, %v1103
        %v1108 = vpack.c.b16 %v1106, %v1105
        %v1112 = vsel %vm985, %v1094, 0
        %1114 = vmatprep.subr.bf16.mxu0 0
        %1115 = vmatpush1.bf16.msra.mxu0 0
        %1116 = vmatprep.subr.bf16.mxu0 0
        %1117 = vmatpush1.bf16.msra.mxu0 0
        %1118 = vmatprep.subr.bf16.mxu0 0
        %1119 = vmatpush1.bf16.msra.mxu0 0
        %1120 = vmatprep.subr.bf16.mxu0 0
        %1121 = vmatpush1.bf16.msra.mxu0 0
        %1122 = vmatprep.subr.bf16.mxu0 0
        %1123 = vmatpush1.bf16.msra.mxu0 0
        %1124 = vmatprep.subr.bf16.mxu0 0
        %1125 = vmatpush1.bf16.msra.mxu0 0
        %1126 = vmatprep.subr.bf16.mxu0 0
        %1127 = vmatpush1.bf16.msra.mxu0 %v1108
        %1128 = vmatprep.subr.bf16.mxu0 0
        %1129 = vmatpush1.bf16.msra.mxu0 %v1107
        %1130 = vmatprep.subr.bf16.mxu0 0
        %1131 = vmatpush2.bf16.msra.mxu0 0
        %1132 = vmatprep.subr.bf16.mxu0 0
        %1133 = vmatpush2.bf16.msra.mxu0 0
        %1134 = vmatprep.subr.bf16.mxu0 0
        %1135 = vmatpush2.bf16.msra.mxu0 0
        %1136 = vmatprep.subr.bf16.mxu0 0
        %1137 = vmatpush2.bf16.msra.mxu0 0
        %1138 = vmatprep.subr.bf16.mxu0 0
        %1139 = vmatpush2.bf16.msra.mxu0 0
        %1140 = vmatprep.subr.bf16.mxu0 0
        %1141 = vmatpush2.bf16.msra.mxu0 0
        %1142 = vmatprep.subr.bf16.mxu0 0
        %1143 = vmatpush2.bf16.msra.mxu0 0
        %1144 = vmatprep.subr.bf16.mxu0 0
        %1145 = vmatpush2.bf16.msra.mxu0 0
        %1146 = vmatprep.mubr.bf16.mxu0 0
        %1147 = vmatmul.mubr.bf16.gmra.mxu0 %v1112
        %v1148 = vpop.f32.mrf.mxu0
        %v1149 = vadd.f32 0.0, %v1148
        %v1150 = vpop.f32.mrf.mxu0
        %v1151 = vpop.f32.mrf.mxu0
        %v1152 = vpop.f32.mrf.mxu0
        %1153 = vdwg.mxu0
        %v1154 = vadd.f32 %v980, %v1149
        %1156 = vrot.lane.b32.xlu0 %v982, 96
        %v1157 = vpop.permute.xlu0 %1156
        %1159 = vrot.lane.b32.xlu0 %v983, 96
        %v1160 = vpop.permute.xlu0 %1159
        %v1162 = vsel %vm985, %v1157, 0
        %v1165 = vsel %vm985, %v1160, 0
        %1167 = vmatprep.subr.bf16.mxu0 0
        %1168 = vmatpush1.bf16.xpose.msra.mxu0 0
        %1169 = vmatprep.subr.bf16.mxu0 0
        %1170 = vmatpush1.bf16.xpose.msra.mxu0 0
        %1171 = vmatprep.subr.bf16.mxu0 0
        %1172 = vmatpush1.bf16.xpose.msra.mxu0 0
        %1173 = vmatprep.subr.bf16.mxu0 0
        %1174 = vmatpush1.bf16.xpose.msra.mxu0 0
        %1175 = vmatprep.subr.bf16.mxu0 0
        %1176 = vmatpush1.bf16.xpose.msra.mxu0 0
        %1177 = vmatprep.subr.bf16.mxu0 0
        %1178 = vmatpush1.bf16.xpose.msra.mxu0 0
        %1179 = vmatprep.subr.bf16.mxu0 0
        %1180 = vmatpush1.bf16.xpose.msra.mxu0 0
        %1181 = vmatprep.subr.bf16.mxu0 0
        %1182 = vmatpush1.bf16.xpose.msra.mxu0 %v1165
        %1183 = vmatprep.subr.bf16.mxu0 0
        %1184 = vmatpush2.bf16.xpose.msra.mxu0 0
        %1185 = vmatprep.subr.bf16.mxu0 0
        %1186 = vmatpush2.bf16.xpose.msra.mxu0 0
        %1187 = vmatprep.subr.bf16.mxu0 0
        %1188 = vmatpush2.bf16.xpose.msra.mxu0 0
        %1189 = vmatprep.subr.bf16.mxu0 0
        %1190 = vmatpush2.bf16.xpose.msra.mxu0 0
        %1191 = vmatprep.subr.bf16.mxu0 0
        %1192 = vmatpush2.bf16.xpose.msra.mxu0 0
        %1193 = vmatprep.subr.bf16.mxu0 0
        %1194 = vmatpush2.bf16.xpose.msra.mxu0 0
        %1195 = vmatprep.subr.bf16.mxu0 0
        %1196 = vmatpush2.bf16.xpose.msra.mxu0 0
        %1197 = vmatprep.subr.bf16.mxu0 0
        %1198 = vmatpush2.bf16.xpose.msra.mxu0 0
        %1199 = vmatprep.mubr.bf16.mxu0 0
        %1200 = vmatmul.mubr.bf16.gmra.mxu0 %v1162
        %v1201 = vpop.f32.mrf.mxu0
        %v1202 = vadd.f32 0.0, %v1201
        %v1203 = vpop.f32.mrf.mxu0
        %v1204 = vpop.f32.mrf.mxu0
        %v1205 = vpop.f32.mrf.mxu0
        %1206 = vdwg.mxu0
        %v1207 = vsel %vm974, -1e+09, %v1202
        %v1208 = vsel %vm1033, %v1207, -inf
        %1209 = vmax.xlane.f32.xlu0 %v1208
        %v1210 = vpop.xlane.xlu0 %1209
        %v1211 = vsub.f32 %v1207, %v1210
        %v1212 = vmul.f32 %v1211, 1.442695
        %v1213 = vpow.pop %v1212
        %v1214 = vsel %vm1033, %v1213, 0.0
        %1215 = vadd.xlane.f32.xlu0 %v1214
        %v1216 = vpop.xlane.xlu0 %1215
        %v1217 = vrcp.pop %v1216
        %v1218 = vmul.f32 %v1213, %v1217
        %s1219 = scalar_lea.vmem %s632, 8 [#allocation17]
        %1220 = vst.msk [vmem:[%s1219] sm:$0xff] %vm1033, %v1218
        %v1221 = vpack.c.bf16 %v1218, %v1218
        %1223 = vrot.lane.b32.xlu0 %v984, 96
        %v1224 = vpop.permute.xlu0 %1223
        %v1226 = vsel %vm1033, %v1221, 0
        %v1229 = vsel %vm1050, %v1224, 0
        %1231 = vmatprep.subr.bf16.mxu0 0
        %1232 = vmatpush1.bf16.msra.mxu0 0
        %1233 = vmatprep.subr.bf16.mxu0 0
        %1234 = vmatpush1.bf16.msra.mxu0 0
        %1235 = vmatprep.subr.bf16.mxu0 0
        %1236 = vmatpush1.bf16.msra.mxu0 0
        %1237 = vmatprep.subr.bf16.mxu0 0
        %1238 = vmatpush1.bf16.msra.mxu0 0
        %1239 = vmatprep.subr.bf16.mxu0 0
        %1240 = vmatpush1.bf16.msra.mxu0 0
        %1241 = vmatprep.subr.bf16.mxu0 0
        %1242 = vmatpush1.bf16.msra.mxu0 0
        %1243 = vmatprep.subr.bf16.mxu0 0
        %1244 = vmatpush1.bf16.msra.mxu0 0
        %1245 = vmatprep.subr.bf16.mxu0 0
        %1246 = vmatpush1.bf16.msra.mxu0 %v1229
        %1247 = vmatprep.subr.bf16.mxu0 0
        %1248 = vmatpush2.bf16.msra.mxu0 0
        %1249 = vmatprep.subr.bf16.mxu0 0
        %1250 = vmatpush2.bf16.msra.mxu0 0
        %1251 = vmatprep.subr.bf16.mxu0 0
        %1252 = vmatpush2.bf16.msra.mxu0 0
        %1253 = vmatprep.subr.bf16.mxu0 0
        %1254 = vmatpush2.bf16.msra.mxu0 0
        %1255 = vmatprep.subr.bf16.mxu0 0
        %1256 = vmatpush2.bf16.msra.mxu0 0
        %1257 = vmatprep.subr.bf16.mxu0 0
        %1258 = vmatpush2.bf16.msra.mxu0 0
        %1259 = vmatprep.subr.bf16.mxu0 0
        %1260 = vmatpush2.bf16.msra.mxu0 0
        %1261 = vmatprep.subr.bf16.mxu0 0
        %1262 = vmatpush2.bf16.msra.mxu0 0
        %1263 = vmatprep.mubr.bf16.mxu0 0
        %1264 = vmatmul.mubr.bf16.gmra.mxu0 %v1226
        %v1265 = vpop.f32.mrf.mxu0
        %v1266 = vadd.f32 0.0, %v1265
        %v1267 = vpop.f32.mrf.mxu0
        %v1268 = vpop.f32.mrf.mxu0
        %v1269 = vpop.f32.mrf.mxu0
        %1270 = vdwg.mxu0
        %v1271 = vpack.c.bf16 %v1266, %v1266
        %v1272 = vld [vmem:[#allocation14 + $0x10] sm:$0xf]
        %v1273 = vld [vmem:[#allocation14 + $0x14] sm:$0xf]
        %v1274 = vld [vmem:[#allocation14 + $0x18] sm:$0xf]
        %v1275 = vld [vmem:[#allocation14 + $0x1c] sm:$0xf]
        %v1280 = vunpack.c.l.b16 %v1272
        %v1281 = vunpack.c.l.b16 %v1273
        %v1282 = vunpack.c.l.b16 %v1274
        %v1283 = vunpack.c.l.b16 %v1275
        %v1284 = vpack.c.b16 %v1281, %v1280
        %v1285 = vpack.c.b16 %v1283, %v1282
        %v1289 = vsel %vm985, %v1271, 0
        %1291 = vmatprep.subr.bf16.mxu0 0
        %1292 = vmatpush1.bf16.msra.mxu0 0
        %1293 = vmatprep.subr.bf16.mxu0 0
        %1294 = vmatpush1.bf16.msra.mxu0 0
        %1295 = vmatprep.subr.bf16.mxu0 0
        %1296 = vmatpush1.bf16.msra.mxu0 0
        %1297 = vmatprep.subr.bf16.mxu0 0
        %1298 = vmatpush1.bf16.msra.mxu0 0
        %1299 = vmatprep.subr.bf16.mxu0 0
        %1300 = vmatpush1.bf16.msra.mxu0 0
        %1301 = vmatprep.subr.bf16.mxu0 0
        %1302 = vmatpush1.bf16.msra.mxu0 0
        %1303 = vmatprep.subr.bf16.mxu0 0
        %1304 = vmatpush1.bf16.msra.mxu0 %v1285
        %1305 = vmatprep.subr.bf16.mxu0 0
        %1306 = vmatpush1.bf16.msra.mxu0 %v1284
        %1307 = vmatprep.subr.bf16.mxu0 0
        %1308 = vmatpush2.bf16.msra.mxu0 0
        %1309 = vmatprep.subr.bf16.mxu0 0
        %1310 = vmatpush2.bf16.msra.mxu0 0
        %1311 = vmatprep.subr.bf16.mxu0 0
        %1312 = vmatpush2.bf16.msra.mxu0 0
        %1313 = vmatprep.subr.bf16.mxu0 0
        %1314 = vmatpush2.bf16.msra.mxu0 0
        %1315 = vmatprep.subr.bf16.mxu0 0
        %1316 = vmatpush2.bf16.msra.mxu0 0
        %1317 = vmatprep.subr.bf16.mxu0 0
        %1318 = vmatpush2.bf16.msra.mxu0 0
        %1319 = vmatprep.subr.bf16.mxu0 0
        %1320 = vmatpush2.bf16.msra.mxu0 0
        %1321 = vmatprep.subr.bf16.mxu0 0
        %1322 = vmatpush2.bf16.msra.mxu0 0
        %1323 = vmatprep.mubr.bf16.mxu0 0
        %1324 = vmatmul.mubr.bf16.gmra.mxu0 %v1289
        %v1325 = vpop.f32.mrf.mxu0
        %v1326 = vadd.f32 0.0, %v1325
        %v1327 = vpop.f32.mrf.mxu0
        %v1328 = vpop.f32.mrf.mxu0
        %v1329 = vpop.f32.mrf.mxu0
        %1330 = vdwg.mxu0
        %v1331 = vadd.f32 %v1154, %v1326
        %1332 = vrot.lane.b32.xlu0 %v982, 64
        %v1333 = vpop.permute.xlu0 %1332
        %1334 = vrot.lane.b32.xlu0 %v983, 64
        %v1335 = vpop.permute.xlu0 %1334
        %v1337 = vsel %vm985, %v1333, 0
        %v1340 = vsel %vm985, %v1335, 0
        %1342 = vmatprep.subr.bf16.mxu0 0
        %1343 = vmatpush1.bf16.xpose.msra.mxu0 0
        %1344 = vmatprep.subr.bf16.mxu0 0
        %1345 = vmatpush1.bf16.xpose.msra.mxu0 0
        %1346 = vmatprep.subr.bf16.mxu0 0
        %1347 = vmatpush1.bf16.xpose.msra.mxu0 0
        %1348 = vmatprep.subr.bf16.mxu0 0
        %1349 = vmatpush1.bf16.xpose.msra.mxu0 0
        %1350 = vmatprep.subr.bf16.mxu0 0
        %1351 = vmatpush1.bf16.xpose.msra.mxu0 0
        %1352 = vmatprep.subr.bf16.mxu0 0
        %1353 = vmatpush1.bf16.xpose.msra.mxu0 0
        %1354 = vmatprep.subr.bf16.mxu0 0
        %1355 = vmatpush1.bf16.xpose.msra.mxu0 0
        %1356 = vmatprep.subr.bf16.mxu0 0
        %1357 = vmatpush1.bf16.xpose.msra.mxu0 %v1340
        %1358 = vmatprep.subr.bf16.mxu0 0
        %1359 = vmatpush2.bf16.xpose.msra.mxu0 0
        %1360 = vmatprep.subr.bf16.mxu0 0
        %1361 = vmatpush2.bf16.xpose.msra.mxu0 0
        %1362 = vmatprep.subr.bf16.mxu0 0
        %1363 = vmatpush2.bf16.xpose.msra.mxu0 0
        %1364 = vmatprep.subr.bf16.mxu0 0
        %1365 = vmatpush2.bf16.xpose.msra.mxu0 0
        %1366 = vmatprep.subr.bf16.mxu0 0
        %1367 = vmatpush2.bf16.xpose.msra.mxu0 0
        %1368 = vmatprep.subr.bf16.mxu0 0
        %1369 = vmatpush2.bf16.xpose.msra.mxu0 0
        %1370 = vmatprep.subr.bf16.mxu0 0
        %1371 = vmatpush2.bf16.xpose.msra.mxu0 0
        %1372 = vmatprep.subr.bf16.mxu0 0
        %1373 = vmatpush2.bf16.xpose.msra.mxu0 0
        %1374 = vmatprep.mubr.bf16.mxu0 0
        %1375 = vmatmul.mubr.bf16.gmra.mxu0 %v1337
        %v1376 = vpop.f32.mrf.mxu0
        %v1377 = vadd.f32 0.0, %v1376
        %v1378 = vpop.f32.mrf.mxu0
        %v1379 = vpop.f32.mrf.mxu0
        %v1380 = vpop.f32.mrf.mxu0
        %1381 = vdwg.mxu0
        %v1382 = vsel %vm974, -1e+09, %v1377
        %v1383 = vsel %vm1033, %v1382, -inf
        %1384 = vmax.xlane.f32.xlu0 %v1383
        %v1385 = vpop.xlane.xlu0 %1384
        %v1386 = vsub.f32 %v1382, %v1385
        %v1387 = vmul.f32 %v1386, 1.442695
        %v1388 = vpow.pop %v1387
        %v1389 = vsel %vm1033, %v1388, 0.0
        %1390 = vadd.xlane.f32.xlu0 %v1389
        %v1391 = vpop.xlane.xlu0 %1390
        %v1392 = vrcp.pop %v1391
        %v1393 = vmul.f32 %v1388, %v1392
        %s1394 = scalar_lea.vmem %s632, 16 [#allocation17]
        %1395 = vst.msk [vmem:[%s1394] sm:$0xff] %vm1033, %v1393
        %v1396 = vpack.c.bf16 %v1393, %v1393
        %1397 = vrot.lane.b32.xlu0 %v984, 64
        %v1398 = vpop.permute.xlu0 %1397
        %v1400 = vsel %vm1033, %v1396, 0
        %v1403 = vsel %vm1050, %v1398, 0
        %1405 = vmatprep.subr.bf16.mxu0 0
        %1406 = vmatpush1.bf16.msra.mxu0 0
        %1407 = vmatprep.subr.bf16.mxu0 0
        %1408 = vmatpush1.bf16.msra.mxu0 0
        %1409 = vmatprep.subr.bf16.mxu0 0
        %1410 = vmatpush1.bf16.msra.mxu0 0
        %1411 = vmatprep.subr.bf16.mxu0 0
        %1412 = vmatpush1.bf16.msra.mxu0 0
        %1413 = vmatprep.subr.bf16.mxu0 0
        %1414 = vmatpush1.bf16.msra.mxu0 0
        %1415 = vmatprep.subr.bf16.mxu0 0
        %1416 = vmatpush1.bf16.msra.mxu0 0
        %1417 = vmatprep.subr.bf16.mxu0 0
        %1418 = vmatpush1.bf16.msra.mxu0 0
        %1419 = vmatprep.subr.bf16.mxu0 0
        %1420 = vmatpush1.bf16.msra.mxu0 %v1403
        %1421 = vmatprep.subr.bf16.mxu0 0
        %1422 = vmatpush2.bf16.msra.mxu0 0
        %1423 = vmatprep.subr.bf16.mxu0 0
        %1424 = vmatpush2.bf16.msra.mxu0 0
        %1425 = vmatprep.subr.bf16.mxu0 0
        %1426 = vmatpush2.bf16.msra.mxu0 0
        %1427 = vmatprep.subr.bf16.mxu0 0
        %1428 = vmatpush2.bf16.msra.mxu0 0
        %1429 = vmatprep.subr.bf16.mxu0 0
        %1430 = vmatpush2.bf16.msra.mxu0 0
        %1431 = vmatprep.subr.bf16.mxu0 0
        %1432 = vmatpush2.bf16.msra.mxu0 0
        %1433 = vmatprep.subr.bf16.mxu0 0
        %1434 = vmatpush2.bf16.msra.mxu0 0
        %1435 = vmatprep.subr.bf16.mxu0 0
        %1436 = vmatpush2.bf16.msra.mxu0 0
        %1437 = vmatprep.mubr.bf16.mxu0 0
        %1438 = vmatmul.mubr.bf16.gmra.mxu0 %v1400
        %v1439 = vpop.f32.mrf.mxu0
        %v1440 = vadd.f32 0.0, %v1439
        %v1441 = vpop.f32.mrf.mxu0
        %v1442 = vpop.f32.mrf.mxu0
        %v1443 = vpop.f32.mrf.mxu0
        %1444 = vdwg.mxu0
        %v1445 = vpack.c.bf16 %v1440, %v1440
        %v1446 = vld [vmem:[#allocation14 + $0x20] sm:$0xf]
        %v1447 = vld [vmem:[#allocation14 + $0x24] sm:$0xf]
        %v1448 = vld [vmem:[#allocation14 + $0x28] sm:$0xf]
        %v1449 = vld [vmem:[#allocation14 + $0x2c] sm:$0xf]
        %v1454 = vunpack.c.l.b16 %v1446
        %v1455 = vunpack.c.l.b16 %v1447
        %v1456 = vunpack.c.l.b16 %v1448
        %v1457 = vunpack.c.l.b16 %v1449
        %v1458 = vpack.c.b16 %v1455, %v1454
        %v1459 = vpack.c.b16 %v1457, %v1456
        %v1463 = vsel %vm985, %v1445, 0
        %1465 = vmatprep.subr.bf16.mxu0 0
        %1466 = vmatpush1.bf16.msra.mxu0 0
        %1467 = vmatprep.subr.bf16.mxu0 0
        %1468 = vmatpush1.bf16.msra.mxu0 0
        %1469 = vmatprep.subr.bf16.mxu0 0
        %1470 = vmatpush1.bf16.msra.mxu0 0
        %1471 = vmatprep.subr.bf16.mxu0 0
        %1472 = vmatpush1.bf16.msra.mxu0 0
        %1473 = vmatprep.subr.bf16.mxu0 0
        %1474 = vmatpush1.bf16.msra.mxu0 0
        %1475 = vmatprep.subr.bf16.mxu0 0
        %1476 = vmatpush1.bf16.msra.mxu0 0
        %1477 = vmatprep.subr.bf16.mxu0 0
        %1478 = vmatpush1.bf16.msra.mxu0 %v1459
        %1479 = vmatprep.subr.bf16.mxu0 0
        %1480 = vmatpush1.bf16.msra.mxu0 %v1458
        %1481 = vmatprep.subr.bf16.mxu0 0
        %1482 = vmatpush2.bf16.msra.mxu0 0
        %1483 = vmatprep.subr.bf16.mxu0 0
        %1484 = vmatpush2.bf16.msra.mxu0 0
        %1485 = vmatprep.subr.bf16.mxu0 0
        %1486 = vmatpush2.bf16.msra.mxu0 0
        %1487 = vmatprep.subr.bf16.mxu0 0
        %1488 = vmatpush2.bf16.msra.mxu0 0
        %1489 = vmatprep.subr.bf16.mxu0 0
        %1490 = vmatpush2.bf16.msra.mxu0 0
        %1491 = vmatprep.subr.bf16.mxu0 0
        %1492 = vmatpush2.bf16.msra.mxu0 0
        %1493 = vmatprep.subr.bf16.mxu0 0
        %1494 = vmatpush2.bf16.msra.mxu0 0
        %1495 = vmatprep.subr.bf16.mxu0 0
        %1496 = vmatpush2.bf16.msra.mxu0 0
        %1497 = vmatprep.mubr.bf16.mxu0 0
        %1498 = vmatmul.mubr.bf16.gmra.mxu0 %v1463
        %v1499 = vpop.f32.mrf.mxu0
        %v1500 = vadd.f32 0.0, %v1499
        %v1501 = vpop.f32.mrf.mxu0
        %v1502 = vpop.f32.mrf.mxu0
        %v1503 = vpop.f32.mrf.mxu0
        %1504 = vdwg.mxu0
        %v1505 = vadd.f32 %v1331, %v1500
        %1506 = vrot.lane.b32.xlu0 %v982, 32
        %v1507 = vpop.permute.xlu0 %1506
        %1508 = vrot.lane.b32.xlu0 %v983, 32
        %v1509 = vpop.permute.xlu0 %1508
        %v1511 = vsel %vm985, %v1507, 0
        %v1514 = vsel %vm985, %v1509, 0
        %1516 = vmatprep.subr.bf16.mxu0 0
        %1517 = vmatpush1.bf16.xpose.msra.mxu0 0
        %1518 = vmatprep.subr.bf16.mxu0 0
        %1519 = vmatpush1.bf16.xpose.msra.mxu0 0
        %1520 = vmatprep.subr.bf16.mxu0 0
        %1521 = vmatpush1.bf16.xpose.msra.mxu0 0
        %1522 = vmatprep.subr.bf16.mxu0 0
        %1523 = vmatpush1.bf16.xpose.msra.mxu0 0
        %1524 = vmatprep.subr.bf16.mxu0 0
        %1525 = vmatpush1.bf16.xpose.msra.mxu0 0
        %1526 = vmatprep.subr.bf16.mxu0 0
        %1527 = vmatpush1.bf16.xpose.msra.mxu0 0
        %1528 = vmatprep.subr.bf16.mxu0 0
        %1529 = vmatpush1.bf16.xpose.msra.mxu0 0
        %1530 = vmatprep.subr.bf16.mxu0 0
        %1531 = vmatpush1.bf16.xpose.msra.mxu0 %v1514
        %1532 = vmatprep.subr.bf16.mxu0 0
        %1533 = vmatpush2.bf16.xpose.msra.mxu0 0
        %1534 = vmatprep.subr.bf16.mxu0 0
        %1535 = vmatpush2.bf16.xpose.msra.mxu0 0
        %1536 = vmatprep.subr.bf16.mxu0 0
        %1537 = vmatpush2.bf16.xpose.msra.mxu0 0
        %1538 = vmatprep.subr.bf16.mxu0 0
        %1539 = vmatpush2.bf16.xpose.msra.mxu0 0
        %1540 = vmatprep.subr.bf16.mxu0 0
        %1541 = vmatpush2.bf16.xpose.msra.mxu0 0
        %1542 = vmatprep.subr.bf16.mxu0 0
        %1543 = vmatpush2.bf16.xpose.msra.mxu0 0
        %1544 = vmatprep.subr.bf16.mxu0 0
        %1545 = vmatpush2.bf16.xpose.msra.mxu0 0
        %1546 = vmatprep.subr.bf16.mxu0 0
        %1547 = vmatpush2.bf16.xpose.msra.mxu0 0
        %1548 = vmatprep.mubr.bf16.mxu0 0
        %1549 = vmatmul.mubr.bf16.gmra.mxu0 %v1511
        %v1550 = vpop.f32.mrf.mxu0
        %v1551 = vadd.f32 0.0, %v1550
        %v1552 = vpop.f32.mrf.mxu0
        %v1553 = vpop.f32.mrf.mxu0
        %v1554 = vpop.f32.mrf.mxu0
        %1555 = vdwg.mxu0
        %v1556 = vsel %vm974, -1e+09, %v1551
        %v1557 = vsel %vm1033, %v1556, -inf
        %1558 = vmax.xlane.f32.xlu0 %v1557
        %v1559 = vpop.xlane.xlu0 %1558
        %v1560 = vsub.f32 %v1556, %v1559
        %v1561 = vmul.f32 %v1560, 1.442695
        %v1562 = vpow.pop %v1561
        %v1563 = vsel %vm1033, %v1562, 0.0
        %1564 = vadd.xlane.f32.xlu0 %v1563
        %v1565 = vpop.xlane.xlu0 %1564
        %v1566 = vrcp.pop %v1565
        %v1567 = vmul.f32 %v1562, %v1566
        %s1568 = scalar_lea.vmem %s632, 24 [#allocation17]
        %1569 = vst.msk [vmem:[%s1568] sm:$0xff] %vm1033, %v1567
        %v1570 = vpack.c.bf16 %v1567, %v1567
        %1571 = vrot.lane.b32.xlu0 %v984, 32
        %v1572 = vpop.permute.xlu0 %1571
        %v1574 = vsel %vm1033, %v1570, 0
        %v1577 = vsel %vm1050, %v1572, 0
        %1579 = vmatprep.subr.bf16.mxu0 0
        %1580 = vmatpush1.bf16.msra.mxu0 0
        %1581 = vmatprep.subr.bf16.mxu0 0
        %1582 = vmatpush1.bf16.msra.mxu0 0
        %1583 = vmatprep.subr.bf16.mxu0 0
        %1584 = vmatpush1.bf16.msra.mxu0 0
        %1585 = vmatprep.subr.bf16.mxu0 0
        %1586 = vmatpush1.bf16.msra.mxu0 0
        %1587 = vmatprep.subr.bf16.mxu0 0
        %1588 = vmatpush1.bf16.msra.mxu0 0
        %1589 = vmatprep.subr.bf16.mxu0 0
        %1590 = vmatpush1.bf16.msra.mxu0 0
        %1591 = vmatprep.subr.bf16.mxu0 0
        %1592 = vmatpush1.bf16.msra.mxu0 0
        %1593 = vmatprep.subr.bf16.mxu0 0
        %1594 = vmatpush1.bf16.msra.mxu0 %v1577
        %1595 = vmatprep.subr.bf16.mxu0 0
        %1596 = vmatpush2.bf16.msra.mxu0 0
        %1597 = vmatprep.subr.bf16.mxu0 0
        %1598 = vmatpush2.bf16.msra.mxu0 0
        %1599 = vmatprep.subr.bf16.mxu0 0
        %1600 = vmatpush2.bf16.msra.mxu0 0
        %1601 = vmatprep.subr.bf16.mxu0 0
        %1602 = vmatpush2.bf16.msra.mxu0 0
        %1603 = vmatprep.subr.bf16.mxu0 0
        %1604 = vmatpush2.bf16.msra.mxu0 0
        %1605 = vmatprep.subr.bf16.mxu0 0
        %1606 = vmatpush2.bf16.msra.mxu0 0
        %1607 = vmatprep.subr.bf16.mxu0 0
        %1608 = vmatpush2.bf16.msra.mxu0 0
        %1609 = vmatprep.subr.bf16.mxu0 0
        %1610 = vmatpush2.bf16.msra.mxu0 0
        %1611 = vmatprep.mubr.bf16.mxu0 0
        %1612 = vmatmul.mubr.bf16.gmra.mxu0 %v1574
        %v1613 = vpop.f32.mrf.mxu0
        %v1614 = vadd.f32 0.0, %v1613
        %v1615 = vpop.f32.mrf.mxu0
        %v1616 = vpop.f32.mrf.mxu0
        %v1617 = vpop.f32.mrf.mxu0
        %1618 = vdwg.mxu0
        %v1619 = vpack.c.bf16 %v1614, %v1614
        %v1620 = vld [vmem:[#allocation14 + $0x30] sm:$0xf]
        %v1621 = vld [vmem:[#allocation14 + $0x34] sm:$0xf]
        %v1622 = vld [vmem:[#allocation14 + $0x38] sm:$0xf]
        %v1623 = vld [vmem:[#allocation14 + $0x3c] sm:$0xf]
        %v1628 = vunpack.c.l.b16 %v1620
        %v1629 = vunpack.c.l.b16 %v1621
        %v1630 = vunpack.c.l.b16 %v1622
        %v1631 = vunpack.c.l.b16 %v1623
        %v1632 = vpack.c.b16 %v1629, %v1628
        %v1633 = vpack.c.b16 %v1631, %v1630
        %v1637 = vsel %vm985, %v1619, 0
        %1639 = vmatprep.subr.bf16.mxu0 0
        %1640 = vmatpush1.bf16.msra.mxu0 0
        %1641 = vmatprep.subr.bf16.mxu0 0
        %1642 = vmatpush1.bf16.msra.mxu0 0
        %1643 = vmatprep.subr.bf16.mxu0 0
        %1644 = vmatpush1.bf16.msra.mxu0 0
        %1645 = vmatprep.subr.bf16.mxu0 0
        %1646 = vmatpush1.bf16.msra.mxu0 0
        %1647 = vmatprep.subr.bf16.mxu0 0
        %1648 = vmatpush1.bf16.msra.mxu0 0
        %1649 = vmatprep.subr.bf16.mxu0 0
        %1650 = vmatpush1.bf16.msra.mxu0 0
        %1651 = vmatprep.subr.bf16.mxu0 0
        %1652 = vmatpush1.bf16.msra.mxu0 %v1633
        %1653 = vmatprep.subr.bf16.mxu0 0
        %1654 = vmatpush1.bf16.msra.mxu0 %v1632
        %1655 = vmatprep.subr.bf16.mxu0 0
        %1656 = vmatpush2.bf16.msra.mxu0 0
        %1657 = vmatprep.subr.bf16.mxu0 0
        %1658 = vmatpush2.bf16.msra.mxu0 0
        %1659 = vmatprep.subr.bf16.mxu0 0
        %1660 = vmatpush2.bf16.msra.mxu0 0
        %1661 = vmatprep.subr.bf16.mxu0 0
        %1662 = vmatpush2.bf16.msra.mxu0 0
        %1663 = vmatprep.subr.bf16.mxu0 0
        %1664 = vmatpush2.bf16.msra.mxu0 0
        %1665 = vmatprep.subr.bf16.mxu0 0
        %1666 = vmatpush2.bf16.msra.mxu0 0
        %1667 = vmatprep.subr.bf16.mxu0 0
        %1668 = vmatpush2.bf16.msra.mxu0 0
        %1669 = vmatprep.subr.bf16.mxu0 0
        %1670 = vmatpush2.bf16.msra.mxu0 0
        %1671 = vmatprep.mubr.bf16.mxu0 0
        %1672 = vmatmul.mubr.bf16.gmra.mxu0 %v1637
        %v1673 = vpop.f32.mrf.mxu0
        %v1674 = vadd.f32 0.0, %v1673
        %v1675 = vpop.f32.mrf.mxu0
        %v1676 = vpop.f32.mrf.mxu0
        %v1677 = vpop.f32.mrf.mxu0
        %1678 = vdwg.mxu0
        %v1679 = vadd.f32 %v1505, %v1674
        %1680 = vst [vmem:[%s625] sm:$0xff] %v1679
        %s1681 = sand.u32 %s322, 1
        %s1682 = scalar_lea.sflag [#allocation4], %s1681
        %s1683 = sand.u32 %s322, 1
        %s1684 = smul.addr %s1683, 8
        %s1685 = scalar_lea.vmem [#allocation16], %s1684
        %s1686 = sand.u32 %s348, 1
        %s1687 = scalar_lea.sflag [#allocation18], %s1686
        %s1688 = sand.u32 %s348, 1
        %s1689 = smul.addr %s1688, 32
        %s1690 = scalar_lea.vmem [#allocation17], %s1689
        // Predicated region
        $region101: #{tpu_custom_call.1} parent=67 // pred_check
          %p1691 = pneg %p332
        $region102: #{tpu_custom_call.1} parent=67 // pred_check_branch
          %1693 = sbr.rel (%p1691) target = $region104
        $region103: #{tpu_custom_call.1} parent=67 // pred_region
          %s1695 = ssub.s32 128, 128
          %1696 = vsyncadd %s1682, %s1695
          %s1697 = smul.addr %s42, 128
          %s1698 = scalar_lea.hbm %s12, %s1697
          %s1700 = sshll.u32 %s1685, 4
          %s1701 = int_to_ptr.vmem [resolvable:$true] %s1700
          %1703 = dma.vmem_to_hbm [thread:$0]  %s1701, 128, %s1698, %s1682
        $region104: #{tpu_custom_call.1} parent=67 // pred_fallthru
          _
        // Predicated region
        $region105: #{tpu_custom_call.1} parent=67 // pred_check
          %p1704 = pneg %p358
        $region106: #{tpu_custom_call.1} parent=67 // pred_check_branch
          %1706 = sbr.rel (%p1704) target = $region108
        $region107: #{tpu_custom_call.1} parent=67 // pred_region
          %s1708 = ssub.s32 512, 512
          %1709 = vsyncadd %s1687, %s1708
          %s1710 = smul.addr %s42, 4
          %s1711 = smul.addr %s1710, 128
          %s1712 = scalar_lea.hbm %s13, %s1711
          %s1713 = sshll.u32 %s1690, 4
          %s1714 = int_to_ptr.vmem [resolvable:$true] %s1713
          %1719 = dma.vmem_to_hbm [thread:$0]  %s1714, 512, %s1712, %s1687, 128, 128, 8
        $region108: #{tpu_custom_call.1} parent=67 // pred_fallthru
          _
      $region68: #{tpu_custom_call.1} parent=5 // pred_fallthru
        _
      %p1720 = scmp.le.s32.totalorder 2, %s37
      // Predicated region
      $region109: #{tpu_custom_call.1} parent=5 // pred_check
        %p1721 = pneg %p1720
      $region110: #{tpu_custom_call.1} parent=5 // pred_check_branch
        %1723 = sbr.rel (%p1721) target = $region112
      $region111: #{tpu_custom_call.1} parent=5 // pred_region
        %s1724 = ssub.s32 %s37, 2
        // Predicated region
        $region113: #{tpu_custom_call.1} parent=111 // pred_check
          %p1725 = pneg %p338
        $region114: #{tpu_custom_call.1} parent=111 // pred_check_branch
          %1727 = sbr.rel (%p1725) target = $region116
        $region115: #{tpu_custom_call.1} parent=111 // pred_region
          %s1728 = sand.u32 %s323, 1
          %s1729 = scalar_lea.sflag [#allocation4], %s1728
          %s1730 = sand.u32 %s323, 1
          %s1731 = smul.addr %s1730, 8
          %s1732 = scalar_lea.vmem [#allocation16], %s1731
          %1733 = dma.done %s1729, 128
        $region116: #{tpu_custom_call.1} parent=111 // pred_fallthru
          _
        // Predicated region
        $region117: #{tpu_custom_call.1} parent=111 // pred_check
          %p1734 = pneg %p364
        $region118: #{tpu_custom_call.1} parent=111 // pred_check_branch
          %1736 = sbr.rel (%p1734) target = $region120
        $region119: #{tpu_custom_call.1} parent=111 // pred_region
          %s1737 = sand.u32 %s349, 1
          %s1738 = scalar_lea.sflag [#allocation18], %s1737
          %s1739 = sand.u32 %s349, 1
          %s1740 = smul.addr %s1739, 32
          %s1741 = scalar_lea.vmem [#allocation17], %s1740
          %1742 = dma.done %s1738, 512
        $region120: #{tpu_custom_call.1} parent=111 // pred_fallthru
          _
      $region112: #{tpu_custom_call.1} parent=5 // pred_fallthru
        _
    $region6: #{tpu_custom_call.1} parent=1 // loop_footer
      %s41 = sadd.s32 1, %s37
    $region7: #{tpu_custom_call.1} parent=1 // loop_footer_branch
      %36 = sbr.rel target = $region3
    $region8: #{tpu_custom_call.1} parent=1 // loop_exit
      _
    %1743 = vsyncpa [#allocation3], 1
    %s1744 = scalar_lea.sflag [#allocation3], 1
    %1745 = vsyncpa %s1744, 1
    %1746 = vsyncpa [#allocation6], 1
    %s1747 = scalar_lea.sflag [#allocation6], 1
    %1748 = vsyncpa %s1747, 1
    %1749 = vsyncpa [#allocation9], 1
    %s1750 = scalar_lea.sflag [#allocation9], 1
    %1751 = vsyncpa %s1750, 1
    %1752 = vsyncpa [#allocation12], 1
    %1753 = vsyncpa [#allocation15], 1
    %1754 = vsyncpa [#allocation4], 1
    %s1755 = scalar_lea.sflag [#allocation4], 1
    %1756 = vsyncpa %s1755, 1
    %1757 = vsyncpa [#allocation18], 1
    %s1758 = scalar_lea.sflag [#allocation18], 1
    %1759 = vsyncpa %s1758, 1

</llo_original>
